<compile_context>
chip_gen: v5e
topology: v5e:2x2
jax: 0.10.0
libtpu: 0.0.40
codegen_flags: <defaults>
</compile_context>

<pallas_src>
import jax
import jax.numpy as jnp
from jax import lax
from jax.experimental import pallas as pl
from jax.experimental.pallas import tpu as pltpu


_SCAN_UNROLL = 8   # inner scan unroll == y-store batch (sublane aligned)
_PAD = 8           # sublane-aligned offset of the conv input in the pad buffer


def _residual_block_kernel(
    # ---- inputs -----------------------------------------------------------
    x_ref,       # (TL, Dm)      activation chunk (one batch element)
    nw_ref,      # (1, Dm)       RMSNorm weight
    win_ref,     # (Dm, 2*Di)    fused in_proj weight  [x-half | res-half]
    cw_ref,      # (K, Di)       depthwise conv weight
    cb_ref,      # (1, Di)       conv bias
    wxp_ref,     # (Di, R+2N)    fused x_proj weight  [dt_lowrank | B | C]
    wdt_ref,     # (R, Di)       dt_proj weight (low rank kept)
    bdt_ref,     # (1, Di)       dt_proj bias
    Aneg_ref,    # (N, Di)       -exp(A_log), transposed
    D_ref,       # (1, Di)       D
    wout_ref,    # (Di, Dm)      out_proj weight
    # ---- outputs ----------------------------------------------------------
    o_ref,       # (TL, Dm)
    # ---- scratch (persists across grid steps) -----------------------------
    xpad_ref,    # (TL+8, Di)    conv input; rows [8-(K-1), 8) carry prev chunk
    state_ref,   # (N, Di)       selective-scan state carried across chunks
    dA_ref,      # (TL, N, Di)   exp(delta * A) slab
    dBu_ref,     # (TL, N, Di)   delta * B * u slab
    c_ref,       # (TL, N, Di)   C broadcast slab
    y_ref,       # (TL, Di)      scan output
):
    TL, Dm = x_ref.shape
    K, Di = cw_ref.shape
    N = Aneg_ref.shape[0]
    R = wdt_ref.shape[0]
    eps = 1e-5
    cdt = win_ref.dtype        # matmul operand dtype (f32 / bf16)
    sdt = dA_ref.dtype         # scan-slab dtype (f32; bf16 only on v6e/v7x)
    j = pl.program_id(1)

    # First chunk of every batch element: clear the carried state.
    @pl.when(j == 0)
    def _():
        if K > 1:
            xpad_ref[_PAD - (K - 1):_PAD, :] = jnp.zeros((K - 1, Di), jnp.float32)
        state_ref[...] = jnp.zeros_like(state_ref)

    x0 = x_ref[...].astype(jnp.float32)

    # ---- RMSNorm ----
    ms = jnp.mean(x0 * x0, axis=-1, keepdims=True)
    xn = x0 * lax.rsqrt(ms + eps) * nw_ref[...]

    # ---- fused in_proj: one (TL, Dm) @ (Dm, 2*Di) matmul, then split ----
    xr = jnp.dot(xn.astype(cdt), win_ref[...], preferred_element_type=jnp.float32)
    xin = xr[:, :Di]
    res = xr[:, Di:]

    # ---- causal depthwise conv1d with cross-chunk carry, then SiLU ----
    # Bulk write lands at sublane-aligned row _PAD (dense store); only the
    # small (K-1)-row carry copy stays masked.
    xpad_ref[_PAD:, :] = xin
    base = _PAD - (K - 1)
    conv = jnp.broadcast_to(cb_ref[...], (TL, Di))
    for k in range(K):                                       # K is tiny/static
        conv = conv + cw_ref[k:k + 1, :] * xpad_ref[base + k:base + k + TL, :]
    if K > 1:  # save the last K-1 input rows as the next chunk's carry
        xpad_ref[base:_PAD, :] = xpad_ref[_PAD + TL - (K - 1):_PAD + TL, :]
    xs = jax.nn.silu(conv)                                   # (TL, Di), f32

    # ---- SSM projections: one fused x_proj [dt_lowrank | B | C] matmul,
    #      then the low-rank dt_proj matmul ----
    xs_c = xs.astype(cdt)
    proj = jnp.dot(xs_c, wxp_ref[...], preferred_element_type=jnp.float32)  # (TL, R+2N)
    dt_low = proj[:, :R]
    Bm = proj[:, R:R + N]                                    # (TL, N)
    Cm = proj[:, R + N:R + 2 * N]                            # (TL, N)
    delta = jax.nn.softplus(
        jnp.dot(dt_low.astype(cdt), wdt_ref[...], preferred_element_type=jnp.float32)
        + bdt_ref[...])                                      # (TL, Di)

    # ---- bulk precompute of scan operands (off the serial recurrence) ----
    A = Aneg_ref[...]                                        # (N, Di) = -exp(A_log)
    dA_ref[...] = jnp.exp((delta[:, None, :] * A[None, :, :]).astype(sdt))
    du = delta * xs                                          # (TL, Di)
    dBu_ref[...] = (Bm[:, :, None] * du[:, None, :]).astype(sdt)
    c_ref[...] = jnp.broadcast_to(Cm[:, :, None], (TL, N, Di)).astype(sdt)

    # ---- selective scan: fori_loop over TL//U blocks (bounds live ranges),
    #      8-step inner unroll, one aligned (8, Di) y store per block ----
    U = _SCAN_UNROLL

    def scan_block(blk, st):
        i0 = pl.multiple_of(blk * U, U)
        rows = []
        for u in range(U):
            i = i0 + u
            st = (dA_ref[i].astype(jnp.float32) * st
                  + dBu_ref[i].astype(jnp.float32))          # (N, Di)
            rows.append(jnp.sum(st * c_ref[i].astype(jnp.float32),
                                axis=0, keepdims=True))      # (1, Di)
        y_ref[pl.ds(i0, U), :] = jnp.concatenate(rows, axis=0)
        return st

    st = lax.fori_loop(0, TL // U, scan_block, state_ref[...])
    state_ref[...] = st                                      # carry to next chunk

    # ---- D skip, gate, out_proj, residual ----
    y = y_ref[...] + xs * D_ref[...]
    y = y * jax.nn.silu(res)
    out = jnp.dot(y.astype(cdt), wout_ref[...], preferred_element_type=jnp.float32)
    o_ref[...] = (out + x0).astype(o_ref.dtype)


def residual_block(x, params, *, tl=None, compute_dtype=jnp.bfloat16,
                   slab_dtype=jnp.float32):
    """Mamba ResidualBlock forward.  x: (B, L, D_model) float32."""
    B, L, Dm = x.shape
    Di = params["w_in_x"].shape[1]
    K = params["conv_w"].shape[0]
    N = params["A_log_T"].shape[0]
    R = params["w_xp_dt"].shape[1]

    if tl is None:
        # Sweep per generation: ~64-128 on v5e/v6e, ~32-64 on v7x (smaller VMEM
        # plus the three (tl, N, Di) scan slabs).
        tl = min(L, 64)
    assert L % tl == 0, "sequence length must be a multiple of the chunk"
    assert tl % _SCAN_UNROLL == 0, "chunk must be a multiple of the scan unroll"
    assert tl >= K - 1, "chunk must cover the conv carry"
    n_chunks = L // tl

    cdt = compute_dtype
    # ---- offline weight prep / fusion (done once in the wrapper) ----
    w_in = jnp.concatenate([params["w_in_x"], params["w_in_res"]],
                           axis=1).astype(cdt)                       # (Dm, 2*Di)
    # fused x_proj, columns = [dt_lowrank | B | C]; dt path kept LOW-RANK
    w_xp = jnp.concatenate(
        [params["w_xp_dt"], params["w_xp_B_T"].T, params["w_xp_C_T"].T],
        axis=1).astype(cdt)                                          # (Di, R+2N)
    w_dt = params["w_dt"].astype(cdt)                                # (R, Di)
    w_out = params["w_out"].astype(cdt)                              # (Di, Dm)
    A_neg = -jnp.exp(params["A_log_T"].astype(jnp.float32))          # (N, Di)

    weights = [params["norm_w"], w_in, params["conv_w"], params["conv_b"],
               w_xp, w_dt, params["b_dt"], A_neg, params["D"], w_out]

    def wspec(a):
        zeros = (0,) * a.ndim
        # Constant-index residents: single-buffer so large-model weights are
        # not duplicated in VMEM by the default double-buffering.
        return pl.BlockSpec(a.shape, lambda b, j: zeros,
                            pipeline_mode=pl.Buffered(1))

    in_specs = [pl.BlockSpec((None, tl, Dm), lambda b, j: (b, j, 0))]
    in_specs += [wspec(w) for w in weights]
    out_specs = pl.BlockSpec((None, tl, Dm), lambda b, j: (b, j, 0))

    slab_bytes = jnp.dtype(slab_dtype).itemsize
    scratch_shapes = [
        pltpu.VMEM((tl + _PAD, Di), jnp.float32),     # conv pad (+ carry rows)
        pltpu.VMEM((N, Di), jnp.float32),             # scan state
        pltpu.VMEM((tl, N, Di), slab_dtype),          # deltaA slab
        pltpu.VMEM((tl, N, Di), slab_dtype),          # delta*B*u slab
        pltpu.VMEM((tl, N, Di), slab_dtype),          # C broadcast slab
        pltpu.VMEM((tl, Di), jnp.float32),            # y
    ]

    # Explicit VMEM budget from the computed footprint (single-buffered
    # weights + scratch + double-buffered activation blocks) with headroom.
    w_bytes = sum(int(w.size) * w.dtype.itemsize for w in weights)
    scratch_bytes = ((tl + _PAD) * Di * 4 + N * Di * 4
                     + 3 * tl * N * Di * slab_bytes + tl * Di * 4)
    act_bytes = 2 * 2 * tl * Dm * 4
    vmem_limit = max(2 * (w_bytes + scratch_bytes + act_bytes) + (4 << 20),
                     16 << 20)
    vmem_limit = min(vmem_limit, 100 << 20)

    flops = B * L * (2 * Dm * 2 * Di + 2 * Di * (R + 2 * N) + 2 * R * Di
                     + 2 * Di * Dm + 2 * K * Di + 6 * N * Di)
    transcendentals = B * L * (N * Di + 3 * Di)
    bytes_accessed = 2 * B * L * Dm * x.dtype.itemsize + w_bytes

    return pl.pallas_call(
        _residual_block_kernel,
        out_shape=jax.ShapeDtypeStruct((B, L, Dm), x.dtype),
        grid=(B, n_chunks),
        in_specs=in_specs,
        out_specs=out_specs,
        scratch_shapes=scratch_shapes,
        compiler_params=pltpu.CompilerParams(
            dimension_semantics=("parallel", "arbitrary"),
            vmem_limit_bytes=int(vmem_limit)),
        cost_estimate=pl.CostEstimate(flops=int(flops),
                                      transcendentals=int(transcendentals),
                                      bytes_accessed=int(bytes_accessed)),
    )(x, *weights)


def reference(x, params):
    """Pure-JAX mirror of the PyTorch ResidualBlock forward (for verification)."""
    eps = 1e-5
    xn = x * lax.rsqrt(jnp.mean(x * x, -1, keepdims=True) + eps) * params["norm_w"][0]
    xin = xn @ params["w_in_x"]
    res = xn @ params["w_in_res"]
    B, L, Di = xin.shape
    K = params["conv_w"].shape[0]
    xpad = jnp.concatenate([jnp.zeros((B, K - 1, Di), jnp.float32), xin], axis=1)
    conv = jnp.broadcast_to(params["conv_b"][0], (B, L, Di))
    for k in range(K):
        conv = conv + params["conv_w"][k] * xpad[:, k:k + L, :]
    xs = jax.nn.silu(conv)
    A = -jnp.exp(params["A_log_T"].T)                       # (Di, N)
    N = A.shape[1]
    dt_low = xs @ params["w_xp_dt"]
    delta = jax.nn.softplus(dt_low @ params["w_dt"] + params["b_dt"][0])
    Bm = xs @ params["w_xp_B_T"].T                          # (B, L, N)
    Cm = xs @ params["w_xp_C_T"].T                          # (B, L, N)
    deltaA = jnp.exp(delta[..., None] * A[None, None])      # (B, L, Di, N)
    dBu = delta[..., None] * Bm[:, :, None, :] * xs[..., None]
    state = jnp.zeros((B, Di, N), jnp.float32)
    ys = []
    for i in range(L):
        state = deltaA[:, i] * state + dBu[:, i]
        ys.append(jnp.sum(state * Cm[:, i, None, :], axis=-1))
    y = jnp.stack(ys, axis=1)
    y = y + xs * params["D"][0]
    y = y * jax.nn.silu(res)
    return y @ params["w_out"] + x


if __name__ == "__main__":
    # Small shapes consistent with the module:
    #   d_model=32, d_inner=64, dt_rank=4, d_ff(= ssm state n)=16, mamba_d_conv=4
    B, L, Dm = 2, 16, 32
    Di, R, N, K = 64, 4, 16, 4

    key = jax.random.PRNGKey(0)
    ks = jax.random.split(key, 12)

    def rnd(k, shape, scale):
        return scale * jax.random.normal(k, shape, dtype=jnp.float32)

    params = {
        "norm_w":   jnp.ones((1, Dm), jnp.float32),
        "w_in_x":   rnd(ks[0], (Dm, Di), Dm ** -0.5),
        "w_in_res": rnd(ks[1], (Dm, Di), Dm ** -0.5),
        "conv_w":   rnd(ks[2], (K, Di), K ** -0.5),
        "conv_b":   rnd(ks[3], (1, Di), 0.1),
        "w_xp_dt":  rnd(ks[4], (Di, R), Di ** -0.5),
        "w_xp_B_T": rnd(ks[5], (N, Di), Di ** -0.5),
        "w_xp_C_T": rnd(ks[6], (N, Di), Di ** -0.5),
        "w_dt":     rnd(ks[7], (R, Di), R ** -0.5),
        "b_dt":     rnd(ks[8], (1, Di), 0.1),
        # A_log[d, n] = log(n+1) in PyTorch; stored transposed (N, Di) here.
        "A_log_T":  jnp.log(jnp.tile(jnp.arange(1, N + 1, dtype=jnp.float32)[:, None],
                                     (1, Di))),
        "D":        jnp.ones((1, Di), jnp.float32),
        "w_out":    rnd(ks[9], (Di, Dm), Di ** -0.5),
    }

    x = jax.random.normal(ks[10], (B, L, Dm), dtype=jnp.float32)
    ref = reference(x, params)

    # f32 matmul operands: tight check against the pure-JAX reference
    # (tl=8 -> two L-chunks, exercising the carried conv/scan state).
    out_f32 = jax.block_until_ready(
        residual_block(x, params, tl=8, compute_dtype=jnp.float32))
    assert out_f32.shape == (B, L, Dm)
    err_f32 = float(jnp.max(jnp.abs(out_f32 - ref)))
    assert jnp.allclose(out_f32, ref, atol=2e-3, rtol=2e-3), f"max abs err {err_f32}"

    # bf16 matmul operands (f32 accumulation): loose sanity check vs f32 ref.
    out_bf16 = jax.block_until_ready(
        residual_block(x, params, tl=8, compute_dtype=jnp.bfloat16))
    rel = float(jnp.linalg.norm(out_bf16 - ref) / jnp.linalg.norm(ref))
    assert rel < 1e-1, f"bf16 relative L2 error {rel}"

    print("KERNEL_OK")
</pallas_src>

<mosaic_0001>
module attributes {stable_mosaic.version = 11 : i64} {
  func.func @_residual_block_kernel(%arg0: i32, %arg1: i32, %arg2: memref<1x8x32xf32, #tpu.memory_space<vmem>>, %arg3: memref<1x32xf32, #tpu.memory_space<vmem>>, %arg4: memref<32x128xf32, #tpu.memory_space<vmem>>, %arg5: memref<4x64xf32, #tpu.memory_space<vmem>>, %arg6: memref<1x64xf32, #tpu.memory_space<vmem>>, %arg7: memref<64x36xf32, #tpu.memory_space<vmem>>, %arg8: memref<4x64xf32, #tpu.memory_space<vmem>>, %arg9: memref<1x64xf32, #tpu.memory_space<vmem>>, %arg10: memref<16x64xf32, #tpu.memory_space<vmem>>, %arg11: memref<1x64xf32, #tpu.memory_space<vmem>>, %arg12: memref<64x32xf32, #tpu.memory_space<vmem>>, %arg13: memref<1x8x32xf32, #tpu.memory_space<vmem>>, %arg14: memref<16x64xf32, #tpu.memory_space<vmem>>, %arg15: memref<16x64xf32, #tpu.memory_space<vmem>>, %arg16: memref<8x16x64xf32, #tpu.memory_space<vmem>>, %arg17: memref<8x16x64xf32, #tpu.memory_space<vmem>>, %arg18: memref<8x16x64xf32, #tpu.memory_space<vmem>>, %arg19: memref<8x64xf32, #tpu.memory_space<vmem>>) attributes {dimension_semantics = [#tpu.dimension_semantics<parallel>, #tpu.dimension_semantics<arbitrary>], iteration_bounds = array<i64: 2, 2>, scalar_prefetch = 0 : i64, scratch_operands = 6 : i64, tpu.core_type = #tpu.core_type<tc>, window_params = [{transform_indices = @transform_0, window_bounds = array<i64: 1, 8, 32>}, {pipeline_mode = #tpu.pipeline_mode<synchronous>, transform_indices = @transform_1, window_bounds = array<i64: 1, 32>}, {pipeline_mode = #tpu.pipeline_mode<synchronous>, transform_indices = @transform_2, window_bounds = array<i64: 32, 128>}, {pipeline_mode = #tpu.pipeline_mode<synchronous>, transform_indices = @transform_3, window_bounds = array<i64: 4, 64>}, {pipeline_mode = #tpu.pipeline_mode<synchronous>, transform_indices = @transform_4, window_bounds = array<i64: 1, 64>}, {pipeline_mode = #tpu.pipeline_mode<synchronous>, transform_indices = @transform_5, window_bounds = array<i64: 64, 36>}, {pipeline_mode = #tpu.pipeline_mode<synchronous>, transform_indices = @transform_6, window_bounds = array<i64: 4, 64>}, {pipeline_mode = #tpu.pipeline_mode<synchronous>, transform_indices = @transform_7, window_bounds = array<i64: 1, 64>}, {pipeline_mode = #tpu.pipeline_mode<synchronous>, transform_indices = @transform_8, window_bounds = array<i64: 16, 64>}, {pipeline_mode = #tpu.pipeline_mode<synchronous>, transform_indices = @transform_9, window_bounds = array<i64: 1, 64>}, {pipeline_mode = #tpu.pipeline_mode<synchronous>, transform_indices = @transform_10, window_bounds = array<i64: 64, 32>}, {transform_indices = @transform_11, window_bounds = array<i64: 1, 8, 32>}]} {
    %c0_i32 = arith.constant 0 : i32
    %0 = arith.cmpi eq, %arg1, %c0_i32 : i32
    %1 = arith.extui %0 : i1 to i32
    %c0_i32_0 = arith.constant 0 : i32
    %2 = arith.cmpi ne, %1, %c0_i32_0 : i32
    scf.if %2 {
      %cst_123 = arith.constant 0.000000e+00 : f32
      %242 = vector.broadcast %cst_123 : f32 to vector<3x64xf32>
      %c5_124 = arith.constant 5 : index
      %c0_125 = arith.constant 0 : index
      %243 = vector.load %arg14[%c5_124, %c0_125] : memref<16x64xf32, #tpu.memory_space<vmem>>, vector<3x64xf32>
      tpu.vector_store %arg14[%c5_124, %c0_125], %242 {strides = array<i32>} : memref<16x64xf32, #tpu.memory_space<vmem>>, vector<3x64xf32>,
      %cst_126 = arith.constant 0.000000e+00 : f32
      %244 = vector.broadcast %cst_126 : f32 to vector<16x64xf32>
      %c0_127 = arith.constant 0 : index
      %c0_128 = arith.constant 0 : index
      %245 = vector.load %arg15[%c0_127, %c0_128] : memref<16x64xf32, #tpu.memory_space<vmem>>, vector<16x64xf32>
      tpu.vector_store %arg15[%c0_127, %c0_128], %244 {strides = array<i32>} : memref<16x64xf32, #tpu.memory_space<vmem>>, vector<16x64xf32>,
    } else {
    }
    %c0 = arith.constant 0 : index
    %c0_1 = arith.constant 0 : index
    %c0_2 = arith.constant 0 : index
    %3 = vector.load %arg2[%c0, %c0_1, %c0_2] : memref<1x8x32xf32, #tpu.memory_space<vmem>>, vector<1x8x32xf32>
    %4 = vector.shape_cast %3 : vector<1x8x32xf32> to vector<8x32xf32>
    %5 = arith.mulf %4, %4 : vector<8x32xf32>
    %cst = arith.constant dense<0.000000e+00> : vector<8xf32>
    %6 = vector.multi_reduction <add>, %5, %cst [1] : vector<8x32xf32> to vector<8xf32>
    %7 = vector.shape_cast %6 : vector<8xf32> to vector<8x1xf32>
    %cst_3 = arith.constant 3.200000e+01 : f32
    %8 = vector.broadcast %cst_3 : f32 to vector<8x1xf32>
    %9 = arith.divf %7, %8 : vector<8x1xf32>
    %cst_4 = arith.constant 9.99999974E-6 : f32
    %10 = vector.broadcast %cst_4 : f32 to vector<8x1xf32>
    %11 = arith.addf %9, %10 : vector<8x1xf32>
    %12 = math.rsqrt %11 : vector<8x1xf32>
    %13 = vector.broadcast %12 : vector<8x1xf32> to vector<8x32xf32>
    %14 = arith.mulf %4, %13 : vector<8x32xf32>
    %c0_5 = arith.constant 0 : index
    %c0_6 = arith.constant 0 : index
    %15 = vector.load %arg3[%c0_5, %c0_6] : memref<1x32xf32, #tpu.memory_space<vmem>>, vector<1x32xf32>
    %16 = vector.broadcast %15 : vector<1x32xf32> to vector<8x32xf32>
    %17 = arith.mulf %14, %16 : vector<8x32xf32>
    %c0_7 = arith.constant 0 : index
    %c0_8 = arith.constant 0 : index
    %18 = vector.load %arg4[%c0_7, %c0_8] : memref<32x128xf32, #tpu.memory_space<vmem>>, vector<32x128xf32>
    %cst_9 = arith.constant dense<0.000000e+00> : vector<8x128xf32>
    %19 = tpu.matmul %17, %18, %cst_9 {dimension_numbers = #tpu.dot_dimension_numbers<[1], [0], [0], [1], [0, 0, 1, 1], [], []>} : vector<8x32xf32>, vector<32x128xf32>, vector<8x128xf32> -> vector<8x128xf32>
    %20 = vector.extract_strided_slice %19 {offsets = [0, 0], sizes = [8, 64], strides = [1, 1]} : vector<8x128xf32> to vector<8x64xf32>
    %21 = vector.extract_strided_slice %19 {offsets = [0, 64], sizes = [8, 64], strides = [1, 1]} : vector<8x128xf32> to vector<8x64xf32>
    %c8 = arith.constant 8 : index
    %c0_10 = arith.constant 0 : index
    %22 = vector.load %arg14[%c8, %c0_10] : memref<16x64xf32, #tpu.memory_space<vmem>>, vector<8x64xf32>
    tpu.vector_store %arg14[%c8, %c0_10], %20 {strides = array<i32>} : memref<16x64xf32, #tpu.memory_space<vmem>>, vector<8x64xf32>,
    %c0_11 = arith.constant 0 : index
    %c0_12 = arith.constant 0 : index
    %23 = vector.load %arg6[%c0_11, %c0_12] : memref<1x64xf32, #tpu.memory_space<vmem>>, vector<1x64xf32>
    %24 = vector.shape_cast %23 : vector<1x64xf32> to vector<1x64xf32>
    %25 = vector.broadcast %24 : vector<1x64xf32> to vector<8x64xf32>
    %c0_13 = arith.constant 0 : index
    %c0_14 = arith.constant 0 : index
    %26 = vector.load %arg5[%c0_13, %c0_14] : memref<4x64xf32, #tpu.memory_space<vmem>>, vector<1x64xf32>
    %c5 = arith.constant 5 : index
    %c0_15 = arith.constant 0 : index
    %27 = vector.load %arg14[%c5, %c0_15] : memref<16x64xf32, #tpu.memory_space<vmem>>, vector<8x64xf32>
    %28 = vector.broadcast %26 : vector<1x64xf32> to vector<8x64xf32>
    %29 = arith.mulf %28, %27 : vector<8x64xf32>
    %30 = arith.addf %25, %29 : vector<8x64xf32>
    %c1 = arith.constant 1 : index
    %c0_16 = arith.constant 0 : index
    %31 = vector.load %arg5[%c1, %c0_16] : memref<4x64xf32, #tpu.memory_space<vmem>>, vector<1x64xf32>
    %c6 = arith.constant 6 : index
    %c0_17 = arith.constant 0 : index
    %32 = vector.load %arg14[%c6, %c0_17] : memref<16x64xf32, #tpu.memory_space<vmem>>, vector<8x64xf32>
    %33 = vector.broadcast %31 : vector<1x64xf32> to vector<8x64xf32>
    %34 = arith.mulf %33, %32 : vector<8x64xf32>
    %35 = arith.addf %30, %34 : vector<8x64xf32>
    %c2 = arith.constant 2 : index
    %c0_18 = arith.constant 0 : index
    %36 = vector.load %arg5[%c2, %c0_18] : memref<4x64xf32, #tpu.memory_space<vmem>>, vector<1x64xf32>
    %c7 = arith.constant 7 : index
    %c0_19 = arith.constant 0 : index
    %37 = vector.load %arg14[%c7, %c0_19] : memref<16x64xf32, #tpu.memory_space<vmem>>, vector<8x64xf32>
    %38 = vector.broadcast %36 : vector<1x64xf32> to vector<8x64xf32>
    %39 = arith.mulf %38, %37 : vector<8x64xf32>
    %40 = arith.addf %35, %39 : vector<8x64xf32>
    %c3 = arith.constant 3 : index
    %c0_20 = arith.constant 0 : index
    %41 = vector.load %arg5[%c3, %c0_20] : memref<4x64xf32, #tpu.memory_space<vmem>>, vector<1x64xf32>
    %c8_21 = arith.constant 8 : index
    %c0_22 = arith.constant 0 : index
    %42 = vector.load %arg14[%c8_21, %c0_22] : memref<16x64xf32, #tpu.memory_space<vmem>>, vector<8x64xf32>
    %43 = vector.broadcast %41 : vector<1x64xf32> to vector<8x64xf32>
    %44 = arith.mulf %43, %42 : vector<8x64xf32>
    %45 = arith.addf %40, %44 : vector<8x64xf32>
    %c13 = arith.constant 13 : index
    %c0_23 = arith.constant 0 : index
    %46 = vector.load %arg14[%c13, %c0_23] : memref<16x64xf32, #tpu.memory_space<vmem>>, vector<3x64xf32>
    %c5_24 = arith.constant 5 : index
    %c0_25 = arith.constant 0 : index
    %47 = vector.load %arg14[%c5_24, %c0_25] : memref<16x64xf32, #tpu.memory_space<vmem>>, vector<3x64xf32>
    tpu.vector_store %arg14[%c5_24, %c0_25], %46 {strides = array<i32>} : memref<16x64xf32, #tpu.memory_space<vmem>>, vector<3x64xf32>,
    %48 = arith.negf %45 : vector<8x64xf32>
    %49 = math.exp %48 : vector<8x64xf32>
    %cst_26 = arith.constant 1.000000e+00 : f32
    %50 = vector.broadcast %cst_26 : f32 to vector<8x64xf32>
    %51 = arith.addf %50, %49 : vector<8x64xf32>
    %52 = arith.divf %50, %51 : vector<8x64xf32>
    %53 = arith.mulf %45, %52 : vector<8x64xf32>
    %c0_27 = arith.constant 0 : index
    %c0_28 = arith.constant 0 : index
    %54 = vector.load %arg7[%c0_27, %c0_28] : memref<64x36xf32, #tpu.memory_space<vmem>>, vector<64x36xf32>
    %cst_29 = arith.constant dense<0.000000e+00> : vector<8x36xf32>
    %55 = tpu.matmul %53, %54, %cst_29 {dimension_numbers = #tpu.dot_dimension_numbers<[1], [0], [0], [1], [0, 0, 1, 1], [], []>} : vector<8x64xf32>, vector<64x36xf32>, vector<8x36xf32> -> vector<8x36xf32>
    %56 = vector.extract_strided_slice %55 {offsets = [0, 0], sizes = [8, 4], strides = [1, 1]} : vector<8x36xf32> to vector<8x4xf32>
    %57 = vector.extract_strided_slice %55 {offsets = [0, 4], sizes = [8, 16], strides = [1, 1]} : vector<8x36xf32> to vector<8x16xf32>
    %58 = vector.extract_strided_slice %55 {offsets = [0, 20], sizes = [8, 16], strides = [1, 1]} : vector<8x36xf32> to vector<8x16xf32>
    %c0_30 = arith.constant 0 : index
    %c0_31 = arith.constant 0 : index
    %59 = vector.load %arg8[%c0_30, %c0_31] : memref<4x64xf32, #tpu.memory_space<vmem>>, vector<4x64xf32>
    %cst_32 = arith.constant dense<0.000000e+00> : vector<8x64xf32>
    %60 = tpu.matmul %56, %59, %cst_32 {dimension_numbers = #tpu.dot_dimension_numbers<[1], [0], [0], [1], [0, 0, 1, 1], [], []>} : vector<8x4xf32>, vector<4x64xf32>, vector<8x64xf32> -> vector<8x64xf32>
    %c0_33 = arith.constant 0 : index
    %c0_34 = arith.constant 0 : index
    %61 = vector.load %arg9[%c0_33, %c0_34] : memref<1x64xf32, #tpu.memory_space<vmem>>, vector<1x64xf32>
    %62 = vector.broadcast %61 : vector<1x64xf32> to vector<8x64xf32>
    %63 = arith.addf %60, %62 : vector<8x64xf32>
    %cst_35 = arith.constant 0.000000e+00 : f32
    %64 = vector.broadcast %cst_35 : f32 to vector<8x64xf32>
    %65 = arith.maximumf %63, %64 : vector<8x64xf32>
    %66 = vector.broadcast %cst_35 : f32 to vector<8x64xf32>
    %67 = arith.subf %63, %66 : vector<8x64xf32>
    %68 = arith.cmpf one, %67, %67 : vector<8x64xf32>
    %69 = vector.broadcast %cst_35 : f32 to vector<8x64xf32>
    %70 = arith.addf %63, %69 : vector<8x64xf32>
    %71 = math.absf %67 : vector<8x64xf32>
    %cst_36 = arith.constant 0.000000e+00 : f32
    %72 = vector.broadcast %cst_36 : f32 to vector<8x64xf32>
    %73 = arith.subf %72, %71 : vector<8x64xf32>
    %74 = math.exp %73 : vector<8x64xf32>
    %75 = math.log1p %74 : vector<8x64xf32>
    %76 = arith.addf %65, %75 : vector<8x64xf32>
    %77 = arith.select %68, %70, %76 : vector<8x64xi1>, vector<8x64xf32>
    %c0_37 = arith.constant 0 : index
    %c0_38 = arith.constant 0 : index
    %78 = vector.load %arg10[%c0_37, %c0_38] : memref<16x64xf32, #tpu.memory_space<vmem>>, vector<16x64xf32>
    %79 = vector.shape_cast %77 : vector<8x64xf32> to vector<8x1x64xf32>
    %80 = vector.shape_cast %78 : vector<16x64xf32> to vector<1x16x64xf32>
    %81 = vector.broadcast %79 : vector<8x1x64xf32> to vector<8x16x64xf32>
    %82 = vector.broadcast %80 : vector<1x16x64xf32> to vector<8x16x64xf32>
    %83 = arith.mulf %81, %82 : vector<8x16x64xf32>
    %84 = math.exp %83 : vector<8x16x64xf32>
    %c0_39 = arith.constant 0 : index
    %c0_40 = arith.constant 0 : index
    %c0_41 = arith.constant 0 : index
    %85 = vector.load %arg16[%c0_39, %c0_40, %c0_41] : memref<8x16x64xf32, #tpu.memory_space<vmem>>, vector<8x16x64xf32>
    tpu.vector_store %arg16[%c0_39, %c0_40, %c0_41], %84 {strides = array<i32>} : memref<8x16x64xf32, #tpu.memory_space<vmem>>, vector<8x16x64xf32>,
    %86 = arith.mulf %77, %53 : vector<8x64xf32>
    %87 = vector.shape_cast %57 : vector<8x16xf32> to vector<8x16x1xf32>
    %88 = vector.shape_cast %86 : vector<8x64xf32> to vector<8x1x64xf32>
    %89 = vector.broadcast %87 : vector<8x16x1xf32> to vector<8x16x64xf32>
    %90 = vector.broadcast %88 : vector<8x1x64xf32> to vector<8x16x64xf32>
    %91 = arith.mulf %89, %90 : vector<8x16x64xf32>
    %c0_42 = arith.constant 0 : index
    %c0_43 = arith.constant 0 : index
    %c0_44 = arith.constant 0 : index
    %92 = vector.load %arg17[%c0_42, %c0_43, %c0_44] : memref<8x16x64xf32, #tpu.memory_space<vmem>>, vector<8x16x64xf32>
    tpu.vector_store %arg17[%c0_42, %c0_43, %c0_44], %91 {strides = array<i32>} : memref<8x16x64xf32, #tpu.memory_space<vmem>>, vector<8x16x64xf32>,
    %93 = vector.shape_cast %58 : vector<8x16xf32> to vector<8x16x1xf32>
    %94 = vector.shape_cast %93 : vector<8x16x1xf32> to vector<8x16x1xf32>
    %95 = vector.broadcast %94 : vector<8x16x1xf32> to vector<8x16x64xf32>
    %c0_45 = arith.constant 0 : index
    %c0_46 = arith.constant 0 : index
    %c0_47 = arith.constant 0 : index
    %96 = vector.load %arg18[%c0_45, %c0_46, %c0_47] : memref<8x16x64xf32, #tpu.memory_space<vmem>>, vector<8x16x64xf32>
    tpu.vector_store %arg18[%c0_45, %c0_46, %c0_47], %95 {strides = array<i32>} : memref<8x16x64xf32, #tpu.memory_space<vmem>>, vector<8x16x64xf32>,
    %c0_48 = arith.constant 0 : index
    %c0_49 = arith.constant 0 : index
    %97 = vector.load %arg15[%c0_48, %c0_49] : memref<16x64xf32, #tpu.memory_space<vmem>>, vector<16x64xf32>
    %c0_i32_50 = arith.constant 0 : i32
    %c8_i32 = arith.constant 8 : i32
    %98 = arith.muli %c0_i32_50, %c8_i32 : i32
    %99 = tpu.assume_multiple %98, 8 : i32
    %c0_i32_51 = arith.constant 0 : i32
    %100 = arith.addi %99, %c0_i32_51 : i32
    %101 = arith.index_cast %100 : i32 to index
    %c0_52 = arith.constant 0 : index
    %c0_53 = arith.constant 0 : index
    %102 = vector.load %arg16[%101, %c0_52, %c0_53] : memref<8x16x64xf32, #tpu.memory_space<vmem>>, vector<1x16x64xf32>
    %103 = vector.shape_cast %102 : vector<1x16x64xf32> to vector<16x64xf32>
    %104 = arith.mulf %103, %97 : vector<16x64xf32>
    %105 = arith.index_cast %100 : i32 to index
    %c0_54 = arith.constant 0 : index
    %c0_55 = arith.constant 0 : index
    %106 = vector.load %arg17[%105, %c0_54, %c0_55] : memref<8x16x64xf32, #tpu.memory_space<vmem>>, vector<1x16x64xf32>
    %107 = vector.shape_cast %106 : vector<1x16x64xf32> to vector<16x64xf32>
    %108 = arith.addf %104, %107 : vector<16x64xf32>
    %109 = arith.index_cast %100 : i32 to index
    %c0_56 = arith.constant 0 : index
    %c0_57 = arith.constant 0 : index
    %110 = vector.load %arg18[%109, %c0_56, %c0_57] : memref<8x16x64xf32, #tpu.memory_space<vmem>>, vector<1x16x64xf32>
    %111 = vector.shape_cast %110 : vector<1x16x64xf32> to vector<16x64xf32>
    %112 = arith.mulf %108, %111 : vector<16x64xf32>
    %cst_58 = arith.constant dense<0.000000e+00> : vector<64xf32>
    %113 = vector.multi_reduction <add>, %112, %cst_58 [0] : vector<16x64xf32> to vector<64xf32>
    %114 = vector.shape_cast %113 : vector<64xf32> to vector<1x64xf32>
    %c1_i32 = arith.constant 1 : i32
    %115 = arith.addi %99, %c1_i32 : i32
    %116 = arith.index_cast %115 : i32 to index
    %c0_59 = arith.constant 0 : index
    %c0_60 = arith.constant 0 : index
    %117 = vector.load %arg16[%116, %c0_59, %c0_60] : memref<8x16x64xf32, #tpu.memory_space<vmem>>, vector<1x16x64xf32>
    %118 = vector.shape_cast %117 : vector<1x16x64xf32> to vector<16x64xf32>
    %119 = arith.mulf %118, %108 : vector<16x64xf32>
    %120 = arith.index_cast %115 : i32 to index
    %c0_61 = arith.constant 0 : index
    %c0_62 = arith.constant 0 : index
    %121 = vector.load %arg17[%120, %c0_61, %c0_62] : memref<8x16x64xf32, #tpu.memory_space<vmem>>, vector<1x16x64xf32>
    %122 = vector.shape_cast %121 : vector<1x16x64xf32> to vector<16x64xf32>
    %123 = arith.addf %119, %122 : vector<16x64xf32>
    %124 = arith.index_cast %115 : i32 to index
    %c0_63 = arith.constant 0 : index
    %c0_64 = arith.constant 0 : index
    %125 = vector.load %arg18[%124, %c0_63, %c0_64] : memref<8x16x64xf32, #tpu.memory_space<vmem>>, vector<1x16x64xf32>
    %126 = vector.shape_cast %125 : vector<1x16x64xf32> to vector<16x64xf32>
    %127 = arith.mulf %123, %126 : vector<16x64xf32>
    %cst_65 = arith.constant dense<0.000000e+00> : vector<64xf32>
    %128 = vector.multi_reduction <add>, %127, %cst_65 [0] : vector<16x64xf32> to vector<64xf32>
    %129 = vector.shape_cast %128 : vector<64xf32> to vector<1x64xf32>
    %c2_i32 = arith.constant 2 : i32
    %130 = arith.addi %99, %c2_i32 : i32
    %131 = arith.index_cast %130 : i32 to index
    %c0_66 = arith.constant 0 : index
    %c0_67 = arith.constant 0 : index
    %132 = vector.load %arg16[%131, %c0_66, %c0_67] : memref<8x16x64xf32, #tpu.memory_space<vmem>>, vector<1x16x64xf32>
    %133 = vector.shape_cast %132 : vector<1x16x64xf32> to vector<16x64xf32>
    %134 = arith.mulf %133, %123 : vector<16x64xf32>
    %135 = arith.index_cast %130 : i32 to index
    %c0_68 = arith.constant 0 : index
    %c0_69 = arith.constant 0 : index
    %136 = vector.load %arg17[%135, %c0_68, %c0_69] : memref<8x16x64xf32, #tpu.memory_space<vmem>>, vector<1x16x64xf32>
    %137 = vector.shape_cast %136 : vector<1x16x64xf32> to vector<16x64xf32>
    %138 = arith.addf %134, %137 : vector<16x64xf32>
    %139 = arith.index_cast %130 : i32 to index
    %c0_70 = arith.constant 0 : index
    %c0_71 = arith.constant 0 : index
    %140 = vector.load %arg18[%139, %c0_70, %c0_71] : memref<8x16x64xf32, #tpu.memory_space<vmem>>, vector<1x16x64xf32>
    %141 = vector.shape_cast %140 : vector<1x16x64xf32> to vector<16x64xf32>
    %142 = arith.mulf %138, %141 : vector<16x64xf32>
    %cst_72 = arith.constant dense<0.000000e+00> : vector<64xf32>
    %143 = vector.multi_reduction <add>, %142, %cst_72 [0] : vector<16x64xf32> to vector<64xf32>
    %144 = vector.shape_cast %143 : vector<64xf32> to vector<1x64xf32>
    %c3_i32 = arith.constant 3 : i32
    %145 = arith.addi %99, %c3_i32 : i32
    %146 = arith.index_cast %145 : i32 to index
    %c0_73 = arith.constant 0 : index
    %c0_74 = arith.constant 0 : index
    %147 = vector.load %arg16[%146, %c0_73, %c0_74] : memref<8x16x64xf32, #tpu.memory_space<vmem>>, vector<1x16x64xf32>
    %148 = vector.shape_cast %147 : vector<1x16x64xf32> to vector<16x64xf32>
    %149 = arith.mulf %148, %138 : vector<16x64xf32>
    %150 = arith.index_cast %145 : i32 to index
    %c0_75 = arith.constant 0 : index
    %c0_76 = arith.constant 0 : index
    %151 = vector.load %arg17[%150, %c0_75, %c0_76] : memref<8x16x64xf32, #tpu.memory_space<vmem>>, vector<1x16x64xf32>
    %152 = vector.shape_cast %151 : vector<1x16x64xf32> to vector<16x64xf32>
    %153 = arith.addf %149, %152 : vector<16x64xf32>
    %154 = arith.index_cast %145 : i32 to index
    %c0_77 = arith.constant 0 : index
    %c0_78 = arith.constant 0 : index
    %155 = vector.load %arg18[%154, %c0_77, %c0_78] : memref<8x16x64xf32, #tpu.memory_space<vmem>>, vector<1x16x64xf32>
    %156 = vector.shape_cast %155 : vector<1x16x64xf32> to vector<16x64xf32>
    %157 = arith.mulf %153, %156 : vector<16x64xf32>
    %cst_79 = arith.constant dense<0.000000e+00> : vector<64xf32>
    %158 = vector.multi_reduction <add>, %157, %cst_79 [0] : vector<16x64xf32> to vector<64xf32>
    %159 = vector.shape_cast %158 : vector<64xf32> to vector<1x64xf32>
    %c4_i32 = arith.constant 4 : i32
    %160 = arith.addi %99, %c4_i32 : i32
    %161 = arith.index_cast %160 : i32 to index
    %c0_80 = arith.constant 0 : index
    %c0_81 = arith.constant 0 : index
    %162 = vector.load %arg16[%161, %c0_80, %c0_81] : memref<8x16x64xf32, #tpu.memory_space<vmem>>, vector<1x16x64xf32>
    %163 = vector.shape_cast %162 : vector<1x16x64xf32> to vector<16x64xf32>
    %164 = arith.mulf %163, %153 : vector<16x64xf32>
    %165 = arith.index_cast %160 : i32 to index
    %c0_82 = arith.constant 0 : index
    %c0_83 = arith.constant 0 : index
    %166 = vector.load %arg17[%165, %c0_82, %c0_83] : memref<8x16x64xf32, #tpu.memory_space<vmem>>, vector<1x16x64xf32>
    %167 = vector.shape_cast %166 : vector<1x16x64xf32> to vector<16x64xf32>
    %168 = arith.addf %164, %167 : vector<16x64xf32>
    %169 = arith.index_cast %160 : i32 to index
    %c0_84 = arith.constant 0 : index
    %c0_85 = arith.constant 0 : index
    %170 = vector.load %arg18[%169, %c0_84, %c0_85] : memref<8x16x64xf32, #tpu.memory_space<vmem>>, vector<1x16x64xf32>
    %171 = vector.shape_cast %170 : vector<1x16x64xf32> to vector<16x64xf32>
    %172 = arith.mulf %168, %171 : vector<16x64xf32>
    %cst_86 = arith.constant dense<0.000000e+00> : vector<64xf32>
    %173 = vector.multi_reduction <add>, %172, %cst_86 [0] : vector<16x64xf32> to vector<64xf32>
    %174 = vector.shape_cast %173 : vector<64xf32> to vector<1x64xf32>
    %c5_i32 = arith.constant 5 : i32
    %175 = arith.addi %99, %c5_i32 : i32
    %176 = arith.index_cast %175 : i32 to index
    %c0_87 = arith.constant 0 : index
    %c0_88 = arith.constant 0 : index
    %177 = vector.load %arg16[%176, %c0_87, %c0_88] : memref<8x16x64xf32, #tpu.memory_space<vmem>>, vector<1x16x64xf32>
    %178 = vector.shape_cast %177 : vector<1x16x64xf32> to vector<16x64xf32>
    %179 = arith.mulf %178, %168 : vector<16x64xf32>
    %180 = arith.index_cast %175 : i32 to index
    %c0_89 = arith.constant 0 : index
    %c0_90 = arith.constant 0 : index
    %181 = vector.load %arg17[%180, %c0_89, %c0_90] : memref<8x16x64xf32, #tpu.memory_space<vmem>>, vector<1x16x64xf32>
    %182 = vector.shape_cast %181 : vector<1x16x64xf32> to vector<16x64xf32>
    %183 = arith.addf %179, %182 : vector<16x64xf32>
    %184 = arith.index_cast %175 : i32 to index
    %c0_91 = arith.constant 0 : index
    %c0_92 = arith.constant 0 : index
    %185 = vector.load %arg18[%184, %c0_91, %c0_92] : memref<8x16x64xf32, #tpu.memory_space<vmem>>, vector<1x16x64xf32>
    %186 = vector.shape_cast %185 : vector<1x16x64xf32> to vector<16x64xf32>
    %187 = arith.mulf %183, %186 : vector<16x64xf32>
    %cst_93 = arith.constant dense<0.000000e+00> : vector<64xf32>
    %188 = vector.multi_reduction <add>, %187, %cst_93 [0] : vector<16x64xf32> to vector<64xf32>
    %189 = vector.shape_cast %188 : vector<64xf32> to vector<1x64xf32>
    %c6_i32 = arith.constant 6 : i32
    %190 = arith.addi %99, %c6_i32 : i32
    %191 = arith.index_cast %190 : i32 to index
    %c0_94 = arith.constant 0 : index
    %c0_95 = arith.constant 0 : index
    %192 = vector.load %arg16[%191, %c0_94, %c0_95] : memref<8x16x64xf32, #tpu.memory_space<vmem>>, vector<1x16x64xf32>
    %193 = vector.shape_cast %192 : vector<1x16x64xf32> to vector<16x64xf32>
    %194 = arith.mulf %193, %183 : vector<16x64xf32>
    %195 = arith.index_cast %190 : i32 to index
    %c0_96 = arith.constant 0 : index
    %c0_97 = arith.constant 0 : index
    %196 = vector.load %arg17[%195, %c0_96, %c0_97] : memref<8x16x64xf32, #tpu.memory_space<vmem>>, vector<1x16x64xf32>
    %197 = vector.shape_cast %196 : vector<1x16x64xf32> to vector<16x64xf32>
    %198 = arith.addf %194, %197 : vector<16x64xf32>
    %199 = arith.index_cast %190 : i32 to index
    %c0_98 = arith.constant 0 : index
    %c0_99 = arith.constant 0 : index
    %200 = vector.load %arg18[%199, %c0_98, %c0_99] : memref<8x16x64xf32, #tpu.memory_space<vmem>>, vector<1x16x64xf32>
    %201 = vector.shape_cast %200 : vector<1x16x64xf32> to vector<16x64xf32>
    %202 = arith.mulf %198, %201 : vector<16x64xf32>
    %cst_100 = arith.constant dense<0.000000e+00> : vector<64xf32>
    %203 = vector.multi_reduction <add>, %202, %cst_100 [0] : vector<16x64xf32> to vector<64xf32>
    %204 = vector.shape_cast %203 : vector<64xf32> to vector<1x64xf32>
    %c7_i32 = arith.constant 7 : i32
    %205 = arith.addi %99, %c7_i32 : i32
    %206 = arith.index_cast %205 : i32 to index
    %c0_101 = arith.constant 0 : index
    %c0_102 = arith.constant 0 : index
    %207 = vector.load %arg16[%206, %c0_101, %c0_102] : memref<8x16x64xf32, #tpu.memory_space<vmem>>, vector<1x16x64xf32>
    %208 = vector.shape_cast %207 : vector<1x16x64xf32> to vector<16x64xf32>
    %209 = arith.mulf %208, %198 : vector<16x64xf32>
    %210 = arith.index_cast %205 : i32 to index
    %c0_103 = arith.constant 0 : index
    %c0_104 = arith.constant 0 : index
    %211 = vector.load %arg17[%210, %c0_103, %c0_104] : memref<8x16x64xf32, #tpu.memory_space<vmem>>, vector<1x16x64xf32>
    %212 = vector.shape_cast %211 : vector<1x16x64xf32> to vector<16x64xf32>
    %213 = arith.addf %209, %212 : vector<16x64xf32>
    %214 = arith.index_cast %205 : i32 to index
    %c0_105 = arith.constant 0 : index
    %c0_106 = arith.constant 0 : index
    %215 = vector.load %arg18[%214, %c0_105, %c0_106] : memref<8x16x64xf32, #tpu.memory_space<vmem>>, vector<1x16x64xf32>
    %216 = vector.shape_cast %215 : vector<1x16x64xf32> to vector<16x64xf32>
    %217 = arith.mulf %213, %216 : vector<16x64xf32>
    %cst_107 = arith.constant dense<0.000000e+00> : vector<64xf32>
    %218 = vector.multi_reduction <add>, %217, %cst_107 [0] : vector<16x64xf32> to vector<64xf32>
    %219 = vector.shape_cast %218 : vector<64xf32> to vector<1x64xf32>
    %220 = tpu.concatenate %114, %129, %144, %159, %174, %189, %204, %219 in 0 : vector<1x64xf32>, vector<1x64xf32>, vector<1x64xf32>, vector<1x64xf32>, vector<1x64xf32>, vector<1x64xf32>, vector<1x64xf32>, vector<1x64xf32> -> vector<8x64xf32>
    %221 = arith.index_cast %99 : i32 to index
    %c0_108 = arith.constant 0 : index
    %222 = vector.load %arg19[%221, %c0_108] : memref<8x64xf32, #tpu.memory_space<vmem>>, vector<8x64xf32>
    tpu.vector_store %arg19[%221, %c0_108], %220 {strides = array<i32>} : memref<8x64xf32, #tpu.memory_space<vmem>>, vector<8x64xf32>,
    %c1_i32_109 = arith.constant 1 : i32
    %c0_110 = arith.constant 0 : index
    %c0_111 = arith.constant 0 : index
    %223 = vector.load %arg15[%c0_110, %c0_111] : memref<16x64xf32, #tpu.memory_space<vmem>>, vector<16x64xf32>
    tpu.vector_store %arg15[%c0_110, %c0_111], %213 {strides = array<i32>} : memref<16x64xf32, #tpu.memory_space<vmem>>, vector<16x64xf32>,
    %c0_112 = arith.constant 0 : index
    %c0_113 = arith.constant 0 : index
    %224 = vector.load %arg19[%c0_112, %c0_113] : memref<8x64xf32, #tpu.memory_space<vmem>>, vector<8x64xf32>
    %c0_114 = arith.constant 0 : index
    %c0_115 = arith.constant 0 : index
    %225 = vector.load %arg11[%c0_114, %c0_115] : memref<1x64xf32, #tpu.memory_space<vmem>>, vector<1x64xf32>
    %226 = vector.broadcast %225 : vector<1x64xf32> to vector<8x64xf32>
    %227 = arith.mulf %53, %226 : vector<8x64xf32>
    %228 = arith.addf %224, %227 : vector<8x64xf32>
    %229 = arith.negf %21 : vector<8x64xf32>
    %230 = math.exp %229 : vector<8x64xf32>
    %cst_116 = arith.constant 1.000000e+00 : f32
    %231 = vector.broadcast %cst_116 : f32 to vector<8x64xf32>
    %232 = arith.addf %231, %230 : vector<8x64xf32>
    %233 = arith.divf %231, %232 : vector<8x64xf32>
    %234 = arith.mulf %21, %233 : vector<8x64xf32>
    %235 = arith.mulf %228, %234 : vector<8x64xf32>
    %c0_117 = arith.constant 0 : index
    %c0_118 = arith.constant 0 : index
    %236 = vector.load %arg12[%c0_117, %c0_118] : memref<64x32xf32, #tpu.memory_space<vmem>>, vector<64x32xf32>
    %cst_119 = arith.constant dense<0.000000e+00> : vector<8x32xf32>
    %237 = tpu.matmul %235, %236, %cst_119 {dimension_numbers = #tpu.dot_dimension_numbers<[1], [0], [0], [1], [0, 0, 1, 1], [], []>} : vector<8x64xf32>, vector<64x32xf32>, vector<8x32xf32> -> vector<8x32xf32>
    %238 = arith.addf %237, %4 : vector<8x32xf32>
    %c0_120 = arith.constant 0 : index
    %c0_121 = arith.constant 0 : index
    %c0_122 = arith.constant 0 : index
    %239 = vector.load %arg13[%c0_120, %c0_121, %c0_122] : memref<1x8x32xf32, #tpu.memory_space<vmem>>, vector<1x8x32xf32>
    %240 = vector.shape_cast %239 : vector<1x8x32xf32> to vector<8x32xf32>
    %241 = vector.shape_cast %238 : vector<8x32xf32> to vector<1x8x32xf32>
    tpu.vector_store %arg13[%c0_120, %c0_121, %c0_122], %241 {strides = array<i32>} : memref<1x8x32xf32, #tpu.memory_space<vmem>>, vector<1x8x32xf32>,
    return
  }
  func.func @transform_0(%arg0: i32, %arg1: i32) -> (i32, i32, i32) {
    %c0_i32 = arith.constant 0 : i32
    %c0_i32_0 = arith.constant 0 : i32
    return %arg0, %arg1, %c0_i32 : i32, i32, i32
  }
  func.func @transform_1(%arg0: i32, %arg1: i32) -> (i32, i32) {
    %c0_i32 = arith.constant 0 : i32
    %c0_i32_0 = arith.constant 0 : i32
    %c0_i32_1 = arith.constant 0 : i32
    return %c0_i32, %c0_i32_0 : i32, i32
  }
  func.func @transform_2(%arg0: i32, %arg1: i32) -> (i32, i32) {
    %c0_i32 = arith.constant 0 : i32
    %c0_i32_0 = arith.constant 0 : i32
    %c0_i32_1 = arith.constant 0 : i32
    return %c0_i32, %c0_i32_0 : i32, i32
  }
  func.func @transform_3(%arg0: i32, %arg1: i32) -> (i32, i32) {
    %c0_i32 = arith.constant 0 : i32
    %c0_i32_0 = arith.constant 0 : i32
    %c0_i32_1 = arith.constant 0 : i32
    return %c0_i32, %c0_i32_0 : i32, i32
  }
  func.func @transform_4(%arg0: i32, %arg1: i32) -> (i32, i32) {
    %c0_i32 = arith.constant 0 : i32
    %c0_i32_0 = arith.constant 0 : i32
    %c0_i32_1 = arith.constant 0 : i32
    return %c0_i32, %c0_i32_0 : i32, i32
  }
  func.func @transform_5(%arg0: i32, %arg1: i32) -> (i32, i32) {
    %c0_i32 = arith.constant 0 : i32
    %c0_i32_0 = arith.constant 0 : i32
    %c0_i32_1 = arith.constant 0 : i32
    return %c0_i32, %c0_i32_0 : i32, i32
  }
  func.func @transform_6(%arg0: i32, %arg1: i32) -> (i32, i32) {
    %c0_i32 = arith.constant 0 : i32
    %c0_i32_0 = arith.constant 0 : i32
    %c0_i32_1 = arith.constant 0 : i32
    return %c0_i32, %c0_i32_0 : i32, i32
  }
  func.func @transform_7(%arg0: i32, %arg1: i32) -> (i32, i32) {
    %c0_i32 = arith.constant 0 : i32
    %c0_i32_0 = arith.constant 0 : i32
    %c0_i32_1 = arith.constant 0 : i32
    return %c0_i32, %c0_i32_0 : i32, i32
  }
  func.func @transform_8(%arg0: i32, %arg1: i32) -> (i32, i32) {
    %c0_i32 = arith.constant 0 : i32
    %c0_i32_0 = arith.constant 0 : i32
    %c0_i32_1 = arith.constant 0 : i32
    return %c0_i32, %c0_i32_0 : i32, i32
  }
  func.func @transform_9(%arg0: i32, %arg1: i32) -> (i32, i32) {
    %c0_i32 = arith.constant 0 : i32
    %c0_i32_0 = arith.constant 0 : i32
    %c0_i32_1 = arith.constant 0 : i32
    return %c0_i32, %c0_i32_0 : i32, i32
  }
  func.func @transform_10(%arg0: i32, %arg1: i32) -> (i32, i32) {
    %c0_i32 = arith.constant 0 : i32
    %c0_i32_0 = arith.constant 0 : i32
    %c0_i32_1 = arith.constant 0 : i32
    return %c0_i32, %c0_i32_0 : i32, i32
  }
  func.func @transform_11(%arg0: i32, %arg1: i32) -> (i32, i32, i32) {
    %c0_i32 = arith.constant 0 : i32
    %c0_i32_0 = arith.constant 0 : i32
    return %arg0, %arg1, %c0_i32 : i32, i32, i32
  }
}

</mosaic_0001>

<llo_original>
// kernel: tpu_custom_call.1
$region0: #{tpu_custom_call.1}
  #allocation0 [shape = 'u32[]', space=smem, size = 0x4, offset = 0x4, fixed_abs, tag = 'smem constant byte address 0x4 - core index']
  #allocation1 [shape = 'u32[72,128]{1,0:T(1,128)}', space=vmem, size = 0x9000, scoped, tag = 'internal scratch']
  #allocation2 [shape = 'f32[16,64]{1,0:T(8,128)}', space=vmem, size = 0x2000, scoped, tag = 'scratch operand']
  #allocation3 [shape = 'f32[16,64]{1,0:T(8,128)}', space=vmem, size = 0x2000, scoped, tag = 'scratch operand']
  #allocation4 [shape = 'f32[8,16,64]{2,1,0:T(8,128)}', space=vmem, size = 0x10000, scoped, tag = 'scratch operand']
  #allocation5 [shape = 'f32[8,16,64]{2,1,0:T(8,128)}', space=vmem, size = 0x10000, scoped, tag = 'scratch operand']
  #allocation6 [shape = 'f32[8,16,64]{2,1,0:T(8,128)}', space=vmem, size = 0x10000, scoped, tag = 'scratch operand']
  #allocation7 [shape = 'f32[8,64]{1,0:T(8,128)}', space=vmem, size = 0x1000, scoped, tag = 'scratch operand']
  %s0 = inlined_call_operand.vmem [shape: f32[2,16,32], index: 0, kind: input, shape index: {}]
  %s1 = inlined_call_operand.vmem [shape: f32[1,32], index: 1, kind: input, shape index: {}]
  %s2 = inlined_call_operand.vmem [shape: f32[32,128], index: 2, kind: input, shape index: {}]
  %s3 = inlined_call_operand.vmem [shape: f32[4,64], index: 3, kind: input, shape index: {}]
  %s4 = inlined_call_operand.vmem [shape: f32[1,64], index: 4, kind: input, shape index: {}]
  %s5 = inlined_call_operand.vmem [shape: f32[64,36], index: 5, kind: input, shape index: {}]
  %s6 = inlined_call_operand.vmem [shape: f32[4,64], index: 6, kind: input, shape index: {}]
  %s7 = inlined_call_operand.vmem [shape: f32[1,64], index: 7, kind: input, shape index: {}]
  %s8 = inlined_call_operand.vmem [shape: f32[16,64], index: 8, kind: input, shape index: {}]
  %s9 = inlined_call_operand.vmem [shape: f32[1,64], index: 9, kind: input, shape index: {}]
  %s10 = inlined_call_operand.vmem [shape: f32[64,32], index: 10, kind: input, shape index: {}]
  %s11 = inlined_call_operand.hbm [shape: f32[2,16,32], index: 11, kind: output, shape index: {}]
  %s12 = sld [smem:[#allocation0]]
  $region81: #{tpu_custom_call.1} parent=0
    _
  %s14 = ssub.s32 1, %s12
  %s15 = scalar_select 0, %s14, %s12
  $region1: #{tpu_custom_call.1} parent=0
    #allocation8 [shape = 'u8[8192]{0}', space=vmem, size = 0x2000, scoped, tag = 'output window, operand 0']
    #allocation9 [shape = 's32[2]{0}', space=sflag, size = 0x8, scoped, tag = 'scoped memory for tpu_custom_call.1']
    %16 = vsyncpa [#allocation9], 0
    %s17 = scalar_lea.sflag [#allocation9], 1
    %18 = vsyncpa %s17, 0
    loop: start=0, step=1, limit=6
    $region2: #{tpu_custom_call.1} parent=1 // loop_pre_header
      _
    $region3: #{tpu_custom_call.1} parent=1 // loop_header
      %s20 = sphi 0, %s24
      %p21 = scmp.ge.s32.totalorder %s20, 6
      %s27 = sphi 0, %s39
      %s28 = sphi 0, %s35
      %s29 = sphi 0, %s27
      %s30 = sphi 0, %s28
      %s31 = sphi 0, %s29
      %s32 = sphi 0, %s30
      %s44 = sphi 0, %s46
      %s47 = sphi 0, %s44
      %s48 = sphi 0, %s47
      %s64 = sphi 0, %s48
      %s68 = sphi 0, %s68
      %s70 = sphi 0, %s68
      %s71 = sphi 0, %s70
      %s85 = sphi 0, %s71
      %s89 = sphi 0, %s89
      %s91 = sphi 0, %s89
      %s92 = sphi 0, %s91
      %s106 = sphi 0, %s92
      %s110 = sphi 0, %s110
      %s112 = sphi 0, %s110
      %s113 = sphi 0, %s112
      %s127 = sphi 0, %s113
      %s131 = sphi 0, %s131
      %s133 = sphi 0, %s131
      %s134 = sphi 0, %s133
      %s148 = sphi 0, %s134
      %s152 = sphi 0, %s152
      %s154 = sphi 0, %s152
      %s155 = sphi 0, %s154
      %s169 = sphi 0, %s155
      %s173 = sphi 0, %s173
      %s175 = sphi 0, %s173
      %s176 = sphi 0, %s175
      %s190 = sphi 0, %s176
      %s194 = sphi 0, %s194
      %s196 = sphi 0, %s194
      %s197 = sphi 0, %s196
      %s211 = sphi 0, %s197
      %s215 = sphi 0, %s215
      %s217 = sphi 0, %s215
      %s218 = sphi 0, %s217
      %s232 = sphi 0, %s218
      %s236 = sphi 0, %s236
      %s238 = sphi 0, %s236
      %s239 = sphi 0, %s238
      %s253 = sphi 0, %s239
      %s257 = sphi 0, %s257
      %s259 = sphi 0, %s257
      %s260 = sphi 0, %s259
      %s274 = sphi 0, %s260
      %s282 = sphi 0, %s284
      %s285 = sphi 0, %s282
      %s286 = sphi 0, %s285
      %s302 = sphi 0, %s286
    $region4: #{tpu_custom_call.1} parent=1 // loop_header_branch
      %23 = sbr.rel (%p21) target = $region8
    $region5: #{tpu_custom_call.1} parent=1 // loop_body
      %s25 = ssub.s32 %s20, 1
      %s26 = ssub.s32 %s20, 2
      %s33 = sadd.s32 1, %s28
      %p34 = scmp.ge.s32.totalorder %s33, 2
      %s35 = scalar_select %p34, 0, %s33
      %s36 = sadd.s32 1, %s27
      %s37 = scalar_select %p34, %s36, %s27
      %p38 = scmp.ge.s32.totalorder %s37, 2
      %s39 = scalar_select %p38, 0, %s37
      %s40 = ssub.s32 %s27, %s39
      %s41 = ssub.s32 %s28, %s35
      %s42 = sor.u32 %s40, %s41
      %p43 = scmp.eq.s32.totalorder %s42, 0
      %s45 = sadd.s32 %s44, 1
      %s46 = scalar_select %p43, %s44, %s45
      %p49 = pneg %p43
      %p50 = scmp.eq.s32.totalorder %s20, 3
      %p51 = por %p49, %p50
      %p52 = scmp.ne.s32.totalorder %s44, %s47
      %p53 = scmp.eq.s32.totalorder %s20, 0
      %p54 = por %p52, %p53
      %p55 = scmp.ne.s32.totalorder %s44, %s47
      %p56 = scmp.eq.s32.totalorder %s25, 3
      %p57 = por %p55, %p56
      %p58 = scmp.ne.s32.totalorder %s47, %s48
      %p59 = scmp.eq.s32.totalorder %s25, 0
      %p60 = por %p58, %p59
      %p61 = scmp.ne.s32.totalorder %s47, %s48
      %p62 = scmp.eq.s32.totalorder %s26, 3
      %p63 = por %p61, %p62
      %p65 = scmp.ne.s32.totalorder %s48, %s64
      %p66 = scmp.eq.s32.totalorder %s26, 0
      %p67 = por %p65, %p66
      %s69 = sadd.s32 %s68, 1
      %p72 = scmp.eq.s32.totalorder %s20, 3
      %p73 = scmp.ne.s32.totalorder %s68, %s70
      %p74 = scmp.eq.s32.totalorder %s20, 0
      %p75 = por %p73, %p74
      %p76 = scmp.ne.s32.totalorder %s68, %s70
      %p77 = scmp.eq.s32.totalorder %s25, 3
      %p78 = por %p76, %p77
      %p79 = scmp.ne.s32.totalorder %s70, %s71
      %p80 = scmp.eq.s32.totalorder %s25, 0
      %p81 = por %p79, %p80
      %p82 = scmp.ne.s32.totalorder %s70, %s71
      %p83 = scmp.eq.s32.totalorder %s26, 3
      %p84 = por %p82, %p83
      %p86 = scmp.ne.s32.totalorder %s71, %s85
      %p87 = scmp.eq.s32.totalorder %s26, 0
      %p88 = por %p86, %p87
      %s90 = sadd.s32 %s89, 1
      %p93 = scmp.eq.s32.totalorder %s20, 3
      %p94 = scmp.ne.s32.totalorder %s89, %s91
      %p95 = scmp.eq.s32.totalorder %s20, 0
      %p96 = por %p94, %p95
      %p97 = scmp.ne.s32.totalorder %s89, %s91
      %p98 = scmp.eq.s32.totalorder %s25, 3
      %p99 = por %p97, %p98
      %p100 = scmp.ne.s32.totalorder %s91, %s92
      %p101 = scmp.eq.s32.totalorder %s25, 0
      %p102 = por %p100, %p101
      %p103 = scmp.ne.s32.totalorder %s91, %s92
      %p104 = scmp.eq.s32.totalorder %s26, 3
      %p105 = por %p103, %p104
      %p107 = scmp.ne.s32.totalorder %s92, %s106
      %p108 = scmp.eq.s32.totalorder %s26, 0
      %p109 = por %p107, %p108
      %s111 = sadd.s32 %s110, 1
      %p114 = scmp.eq.s32.totalorder %s20, 3
      %p115 = scmp.ne.s32.totalorder %s110, %s112
      %p116 = scmp.eq.s32.totalorder %s20, 0
      %p117 = por %p115, %p116
      %p118 = scmp.ne.s32.totalorder %s110, %s112
      %p119 = scmp.eq.s32.totalorder %s25, 3
      %p120 = por %p118, %p119
      %p121 = scmp.ne.s32.totalorder %s112, %s113
      %p122 = scmp.eq.s32.totalorder %s25, 0
      %p123 = por %p121, %p122
      %p124 = scmp.ne.s32.totalorder %s112, %s113
      %p125 = scmp.eq.s32.totalorder %s26, 3
      %p126 = por %p124, %p125
      %p128 = scmp.ne.s32.totalorder %s113, %s127
      %p129 = scmp.eq.s32.totalorder %s26, 0
      %p130 = por %p128, %p129
      %s132 = sadd.s32 %s131, 1
      %p135 = scmp.eq.s32.totalorder %s20, 3
      %p136 = scmp.ne.s32.totalorder %s131, %s133
      %p137 = scmp.eq.s32.totalorder %s20, 0
      %p138 = por %p136, %p137
      %p139 = scmp.ne.s32.totalorder %s131, %s133
      %p140 = scmp.eq.s32.totalorder %s25, 3
      %p141 = por %p139, %p140
      %p142 = scmp.ne.s32.totalorder %s133, %s134
      %p143 = scmp.eq.s32.totalorder %s25, 0
      %p144 = por %p142, %p143
      %p145 = scmp.ne.s32.totalorder %s133, %s134
      %p146 = scmp.eq.s32.totalorder %s26, 3
      %p147 = por %p145, %p146
      %p149 = scmp.ne.s32.totalorder %s134, %s148
      %p150 = scmp.eq.s32.totalorder %s26, 0
      %p151 = por %p149, %p150
      %s153 = sadd.s32 %s152, 1
      %p156 = scmp.eq.s32.totalorder %s20, 3
      %p157 = scmp.ne.s32.totalorder %s152, %s154
      %p158 = scmp.eq.s32.totalorder %s20, 0
      %p159 = por %p157, %p158
      %p160 = scmp.ne.s32.totalorder %s152, %s154
      %p161 = scmp.eq.s32.totalorder %s25, 3
      %p162 = por %p160, %p161
      %p163 = scmp.ne.s32.totalorder %s154, %s155
      %p164 = scmp.eq.s32.totalorder %s25, 0
      %p165 = por %p163, %p164
      %p166 = scmp.ne.s32.totalorder %s154, %s155
      %p167 = scmp.eq.s32.totalorder %s26, 3
      %p168 = por %p166, %p167
      %p170 = scmp.ne.s32.totalorder %s155, %s169
      %p171 = scmp.eq.s32.totalorder %s26, 0
      %p172 = por %p170, %p171
      %s174 = sadd.s32 %s173, 1
      %p177 = scmp.eq.s32.totalorder %s20, 3
      %p178 = scmp.ne.s32.totalorder %s173, %s175
      %p179 = scmp.eq.s32.totalorder %s20, 0
      %p180 = por %p178, %p179
      %p181 = scmp.ne.s32.totalorder %s173, %s175
      %p182 = scmp.eq.s32.totalorder %s25, 3
      %p183 = por %p181, %p182
      %p184 = scmp.ne.s32.totalorder %s175, %s176
      %p185 = scmp.eq.s32.totalorder %s25, 0
      %p186 = por %p184, %p185
      %p187 = scmp.ne.s32.totalorder %s175, %s176
      %p188 = scmp.eq.s32.totalorder %s26, 3
      %p189 = por %p187, %p188
      %p191 = scmp.ne.s32.totalorder %s176, %s190
      %p192 = scmp.eq.s32.totalorder %s26, 0
      %p193 = por %p191, %p192
      %s195 = sadd.s32 %s194, 1
      %p198 = scmp.eq.s32.totalorder %s20, 3
      %p199 = scmp.ne.s32.totalorder %s194, %s196
      %p200 = scmp.eq.s32.totalorder %s20, 0
      %p201 = por %p199, %p200
      %p202 = scmp.ne.s32.totalorder %s194, %s196
      %p203 = scmp.eq.s32.totalorder %s25, 3
      %p204 = por %p202, %p203
      %p205 = scmp.ne.s32.totalorder %s196, %s197
      %p206 = scmp.eq.s32.totalorder %s25, 0
      %p207 = por %p205, %p206
      %p208 = scmp.ne.s32.totalorder %s196, %s197
      %p209 = scmp.eq.s32.totalorder %s26, 3
      %p210 = por %p208, %p209
      %p212 = scmp.ne.s32.totalorder %s197, %s211
      %p213 = scmp.eq.s32.totalorder %s26, 0
      %p214 = por %p212, %p213
      %s216 = sadd.s32 %s215, 1
      %p219 = scmp.eq.s32.totalorder %s20, 3
      %p220 = scmp.ne.s32.totalorder %s215, %s217
      %p221 = scmp.eq.s32.totalorder %s20, 0
      %p222 = por %p220, %p221
      %p223 = scmp.ne.s32.totalorder %s215, %s217
      %p224 = scmp.eq.s32.totalorder %s25, 3
      %p225 = por %p223, %p224
      %p226 = scmp.ne.s32.totalorder %s217, %s218
      %p227 = scmp.eq.s32.totalorder %s25, 0
      %p228 = por %p226, %p227
      %p229 = scmp.ne.s32.totalorder %s217, %s218
      %p230 = scmp.eq.s32.totalorder %s26, 3
      %p231 = por %p229, %p230
      %p233 = scmp.ne.s32.totalorder %s218, %s232
      %p234 = scmp.eq.s32.totalorder %s26, 0
      %p235 = por %p233, %p234
      %s237 = sadd.s32 %s236, 1
      %p240 = scmp.eq.s32.totalorder %s20, 3
      %p241 = scmp.ne.s32.totalorder %s236, %s238
      %p242 = scmp.eq.s32.totalorder %s20, 0
      %p243 = por %p241, %p242
      %p244 = scmp.ne.s32.totalorder %s236, %s238
      %p245 = scmp.eq.s32.totalorder %s25, 3
      %p246 = por %p244, %p245
      %p247 = scmp.ne.s32.totalorder %s238, %s239
      %p248 = scmp.eq.s32.totalorder %s25, 0
      %p249 = por %p247, %p248
      %p250 = scmp.ne.s32.totalorder %s238, %s239
      %p251 = scmp.eq.s32.totalorder %s26, 3
      %p252 = por %p250, %p251
      %p254 = scmp.ne.s32.totalorder %s239, %s253
      %p255 = scmp.eq.s32.totalorder %s26, 0
      %p256 = por %p254, %p255
      %s258 = sadd.s32 %s257, 1
      %p261 = scmp.eq.s32.totalorder %s20, 3
      %p262 = scmp.ne.s32.totalorder %s257, %s259
      %p263 = scmp.eq.s32.totalorder %s20, 0
      %p264 = por %p262, %p263
      %p265 = scmp.ne.s32.totalorder %s257, %s259
      %p266 = scmp.eq.s32.totalorder %s25, 3
      %p267 = por %p265, %p266
      %p268 = scmp.ne.s32.totalorder %s259, %s260
      %p269 = scmp.eq.s32.totalorder %s25, 0
      %p270 = por %p268, %p269
      %p271 = scmp.ne.s32.totalorder %s259, %s260
      %p272 = scmp.eq.s32.totalorder %s26, 3
      %p273 = por %p271, %p272
      %p275 = scmp.ne.s32.totalorder %s260, %s274
      %p276 = scmp.eq.s32.totalorder %s26, 0
      %p277 = por %p275, %p276
      %s278 = ssub.s32 %s27, %s39
      %s279 = ssub.s32 %s28, %s35
      %s280 = sor.u32 %s278, %s279
      %p281 = scmp.eq.s32.totalorder %s280, 0
      %s283 = sadd.s32 %s282, 1
      %s284 = scalar_select %p281, %s282, %s283
      %p287 = pneg %p281
      %p288 = scmp.eq.s32.totalorder %s20, 3
      %p289 = por %p287, %p288
      %p290 = scmp.ne.s32.totalorder %s282, %s285
      %p291 = scmp.eq.s32.totalorder %s20, 0
      %p292 = por %p290, %p291
      %p293 = scmp.ne.s32.totalorder %s282, %s285
      %p294 = scmp.eq.s32.totalorder %s25, 3
      %p295 = por %p293, %p294
      %p296 = scmp.ne.s32.totalorder %s285, %s286
      %p297 = scmp.eq.s32.totalorder %s25, 0
      %p298 = por %p296, %p297
      %p299 = scmp.ne.s32.totalorder %s285, %s286
      %p300 = scmp.eq.s32.totalorder %s26, 3
      %p301 = por %p299, %p300
      %p303 = scmp.ne.s32.totalorder %s286, %s302
      %p304 = scmp.eq.s32.totalorder %s26, 0
      %p305 = por %p303, %p304
      %p306 = scmp.le.s32.totalorder 1, %s20
      %p307 = scmp.lt.s32.totalorder %s20, 5
      %p308 = pnand %p306, %p307
      %p309 = pneg %p308
      // Predicated region
      $region9: #{tpu_custom_call.1} parent=5 // pred_check
        _
      $region10: #{tpu_custom_call.1} parent=5 // pred_check_branch
        %311 = sbr.rel (%p308) target = $region12
      $region11: #{tpu_custom_call.1} parent=5 // pred_region
        %s312 = ssub.s32 %s20, 1
        // Predicated region
        $region13: #{tpu_custom_call.1} parent=11 // pred_check
          %p313 = pneg %p81
        $region14: #{tpu_custom_call.1} parent=11 // pred_check_branch
          %315 = sbr.rel (%p313) target = $region16
        $region15: #{tpu_custom_call.1} parent=11 // pred_region
          _
        $region16: #{tpu_custom_call.1} parent=11 // pred_fallthru
          _
        // Predicated region
        $region17: #{tpu_custom_call.1} parent=11 // pred_check
          %p316 = pneg %p102
        $region18: #{tpu_custom_call.1} parent=11 // pred_check_branch
          %318 = sbr.rel (%p316) target = $region20
        $region19: #{tpu_custom_call.1} parent=11 // pred_region
          _
        $region20: #{tpu_custom_call.1} parent=11 // pred_fallthru
          _
        // Predicated region
        $region21: #{tpu_custom_call.1} parent=11 // pred_check
          %p319 = pneg %p123
        $region22: #{tpu_custom_call.1} parent=11 // pred_check_branch
          %321 = sbr.rel (%p319) target = $region24
        $region23: #{tpu_custom_call.1} parent=11 // pred_region
          _
        $region24: #{tpu_custom_call.1} parent=11 // pred_fallthru
          _
        // Predicated region
        $region25: #{tpu_custom_call.1} parent=11 // pred_check
          %p322 = pneg %p144
        $region26: #{tpu_custom_call.1} parent=11 // pred_check_branch
          %324 = sbr.rel (%p322) target = $region28
        $region27: #{tpu_custom_call.1} parent=11 // pred_region
          _
        $region28: #{tpu_custom_call.1} parent=11 // pred_fallthru
          _
        // Predicated region
        $region29: #{tpu_custom_call.1} parent=11 // pred_check
          %p325 = pneg %p165
        $region30: #{tpu_custom_call.1} parent=11 // pred_check_branch
          %327 = sbr.rel (%p325) target = $region32
        $region31: #{tpu_custom_call.1} parent=11 // pred_region
          _
        $region32: #{tpu_custom_call.1} parent=11 // pred_fallthru
          _
        // Predicated region
        $region33: #{tpu_custom_call.1} parent=11 // pred_check
          %p328 = pneg %p186
        $region34: #{tpu_custom_call.1} parent=11 // pred_check_branch
          %330 = sbr.rel (%p328) target = $region36
        $region35: #{tpu_custom_call.1} parent=11 // pred_region
          _
        $region36: #{tpu_custom_call.1} parent=11 // pred_fallthru
          _
        // Predicated region
        $region37: #{tpu_custom_call.1} parent=11 // pred_check
          %p331 = pneg %p207
        $region38: #{tpu_custom_call.1} parent=11 // pred_check_branch
          %333 = sbr.rel (%p331) target = $region40
        $region39: #{tpu_custom_call.1} parent=11 // pred_region
          _
        $region40: #{tpu_custom_call.1} parent=11 // pred_fallthru
          _
        // Predicated region
        $region41: #{tpu_custom_call.1} parent=11 // pred_check
          %p334 = pneg %p228
        $region42: #{tpu_custom_call.1} parent=11 // pred_check_branch
          %336 = sbr.rel (%p334) target = $region44
        $region43: #{tpu_custom_call.1} parent=11 // pred_region
          _
        $region44: #{tpu_custom_call.1} parent=11 // pred_fallthru
          _
        // Predicated region
        $region45: #{tpu_custom_call.1} parent=11 // pred_check
          %p337 = pneg %p249
        $region46: #{tpu_custom_call.1} parent=11 // pred_check_branch
          %339 = sbr.rel (%p337) target = $region48
        $region47: #{tpu_custom_call.1} parent=11 // pred_region
          _
        $region48: #{tpu_custom_call.1} parent=11 // pred_fallthru
          _
        // Predicated region
        $region49: #{tpu_custom_call.1} parent=11 // pred_check
          %p340 = pneg %p270
        $region50: #{tpu_custom_call.1} parent=11 // pred_check_branch
          %342 = sbr.rel (%p340) target = $region52
        $region51: #{tpu_custom_call.1} parent=11 // pred_region
          _
        $region52: #{tpu_custom_call.1} parent=11 // pred_fallthru
          _
      $region12: #{tpu_custom_call.1} parent=5 // pred_fallthru
        _
      %p343 = scmp.lt.s32.totalorder %s20, 4
      // Predicated region
      $region53: #{tpu_custom_call.1} parent=5 // pred_check
        %p344 = pneg %p343
      $region54: #{tpu_custom_call.1} parent=5 // pred_check_branch
        %346 = sbr.rel (%p344) target = $region56
      $region55: #{tpu_custom_call.1} parent=5 // pred_region
        // Predicated region
        $region57: #{tpu_custom_call.1} parent=55 // pred_check
          %p347 = pneg %p54
        $region58: #{tpu_custom_call.1} parent=55 // pred_check_branch
          %349 = sbr.rel (%p347) target = $region60
        $region59: #{tpu_custom_call.1} parent=55 // pred_region
          %p350 = scmp.lt.s32.totalorder %s27, 1
          %s351 = scalar_select %p350, %s27, 1
          %p352 = scmp.lt.s32.totalorder %s28, 1
          %s353 = scalar_select %p352, %s28, 1
          %s354 = smul.addr %s351, 2
          %s355 = sadd.s32 %s353, %s354
          %s356 = smul.addr %s355, 8
          %s357 = scalar_lea.vmem %s0, %s356
        $region60: #{tpu_custom_call.1} parent=55 // pred_fallthru
          _
      $region56: #{tpu_custom_call.1} parent=5 // pred_fallthru
        _
      %p358 = scmp.le.s32.totalorder 1, %s20
      %p359 = scmp.lt.s32.totalorder %s20, 5
      %p360 = pnand %p358, %p359
      %p361 = pneg %p360
      // Predicated region
      $region61: #{tpu_custom_call.1} parent=5 // pred_check
        _
      $region62: #{tpu_custom_call.1} parent=5 // pred_check_branch
        %363 = sbr.rel (%p360) target = $region64
      $region63: #{tpu_custom_call.1} parent=5 // pred_region
        %s364 = ssub.s32 %s20, 1
        %p365 = scmp.lt.s32.totalorder %s29, 1
        %s366 = scalar_select %p365, %s29, 1
        %p367 = scmp.lt.s32.totalorder %s30, 1
        %s368 = scalar_select %p367, %s30, 1
        %s369 = smul.addr %s366, 2
        %s370 = sadd.s32 %s368, %s369
        %s371 = smul.addr %s370, 8
        %s372 = scalar_lea.vmem %s0, %s371
        %p373 = pneg %p60
        %p374 = pneg %p57
        %p375 = pneg %p81
        %p376 = pneg %p78
        %p377 = pneg %p102
        %p378 = pneg %p99
        %p379 = pneg %p123
        %p380 = pneg %p120
        %p381 = pneg %p144
        %p382 = pneg %p141
        %p383 = pneg %p165
        %p384 = pneg %p162
        %p385 = pneg %p186
        %p386 = pneg %p183
        %p387 = pneg %p207
        %p388 = pneg %p204
        %p389 = pneg %p228
        %p390 = pneg %p225
        %p391 = pneg %p249
        %p392 = pneg %p246
        %p393 = pneg %p270
        %p394 = pneg %p267
        %p395 = pneg %p298
        %p396 = pneg %p295
        %s397 = sand.u32 %s285, 1
        %s398 = scalar_lea.sflag [#allocation9], %s397
        %s399 = sand.u32 %s285, 1
        %s400 = smul.addr %s399, 8
        %s401 = scalar_lea.vmem [#allocation8], %s400
        %p402 = scmp.lt.s32.totalorder %s29, 1
        %s403 = scalar_select %p402, %s29, 1
        %p404 = scmp.lt.s32.totalorder %s30, 1
        %s405 = scalar_select %p404, %s30, 1
        %s406 = smul.addr %s403, 2
        %s407 = sadd.s32 %s405, %s406
        %s408 = smul.addr %s407, 8
        %s409 = scalar_lea.vmem %s0, %s408
        %p410 = scmp.eq.s32.totalorder %s30, 0
        // Predicated region
        $region65: #{tpu_custom_call.1} parent=63 // pred_check
          %p411 = pneg %p410
        $region66: #{tpu_custom_call.1} parent=63 // pred_check_branch
          %413 = sbr.rel (%p411) target = $region68
        $region67: #{tpu_custom_call.1} parent=63 // pred_region
          %vm414 = vcmask 518144
          %415 = vst.msk [vmem:[#allocation2 + $0x5] sm:$0x7] %vm414, 0.0
          %vm416 = vcmask 523264
          %417 = vst.msk [vmem:[#allocation3] sm:$0xff] %vm416, 0.0
          %418 = vst.msk [vmem:[#allocation3 + $0x8] sm:$0xff] %vm416, 0.0
        $region68: #{tpu_custom_call.1} parent=63 // pred_fallthru
          _
        %v419 = vld [vmem:[%s409] sm:$0xff]
        %v420 = vmul.f32 %v419, %v419
        %vm421 = vcmask 261120
        %v422 = vsel %vm421, %v420, 0.0
        %423 = vadd.xlane.f32.xlu0 %v422
        %v424 = vpop.xlane.xlu0 %423
        %v425 = vrcp.pop 32.0
        %v426 = vmul.f32 32.0, %v425
        %v427 = vsub.f32 1.0, %v426
        %v428 = vmul.f32 %v425, %v427
        %v429 = vadd.f32 %v425, %v428
        %vm430 = vweird.f32 %v425
        %v431 = vsel %vm430, %v425, %v429
        %v432 = vmul.f32 %v424, %v431
        %v433 = vadd.f32 %v432, 1e-05
        %v434 = vrsqrt.pop %v433
        %v435 = vmul.f32 %v434, %v433
        %v436 = vmul.f32 %v435, %v434
        %v437 = vmul.f32 0.5, %v436
        %v438 = vsub.f32 1.5, %v437
        %v439 = vmul.f32 %v434, %v438
        %vm440 = vweird.f32 %v433
        %vm441 = vweird.f32 %v434
        %vm442 = vmor %vm440, %vm441
        %v443 = vsel %vm442, %v434, %v439
        %v444 = vmul.f32 %v419, %v443
        %v445 = vld [vmem:[%s1] sm:$0x1]
        %v447 = vperm.slane %v445, 0
        %v449 = vmul.f32 %v444, %v447
        %v450 = vld [vmem:[%s2] sm:$0xff]
        %v451 = vld [vmem:[%s2 + $0x8] sm:$0xff]
        %v452 = vld [vmem:[%s2 + $0x10] sm:$0xff]
        %v453 = vld [vmem:[%s2 + $0x18] sm:$0xff]
        %v455 = vsel %vm421, %v449, 0
        %457 = vmatpush.msra.mxu0 0.0
        %458 = vmatpush.msra.mxu0 0.0
        %459 = vmatpush.msra.mxu0 0.0
        %460 = vmatpush.msra.mxu0 0.0
        %461 = vmatpush.msra.mxu0 0.0
        %462 = vmatpush.msra.mxu0 0.0
        %463 = vmatpush.msra.mxu0 0.0
        %464 = vmatpush.msra.mxu0 0.0
        %465 = vmatpush.msra.mxu0 0.0
        %466 = vmatpush.msra.mxu0 0.0
        %467 = vmatpush.msra.mxu0 0.0
        %468 = vmatpush.msra.mxu0 0.0
        %469 = vmatpush.msra.mxu0 %v453
        %470 = vmatpush.msra.mxu0 %v452
        %471 = vmatpush.msra.mxu0 %v451
        %472 = vmatpush.msra.mxu0 %v450
        %473 = vmatmul.f32.gmra.mxu0 %v455
        %v474 = vpop.f32.mrf.mxu0
        %v475 = vadd.f32 0.0, %v474
        %476 = vdwg.mxu0
        %vm477 = vcmask 523264
        %478 = vst.msk [vmem:[#allocation2 + $0x8] sm:$0xff] %vm477, %v475
        %v479 = vld [vmem:[%s4] sm:$0x1]
        %v481 = vperm.slane %v479, 0
        %v483 = vld [vmem:[%s3] sm:$0x1]
        %v484 = vld [vmem:[#allocation2 + $0x5] sm:$0xff]
        %v485 = vperm.slane %v483, 0
        %v486 = vmul.f32 %v485, %v484
        %v487 = vadd.f32 %v481, %v486
        %v488 = vld [vmem:[%s3 + $0x1] sm:$0x1]
        %v489 = vld [vmem:[#allocation2 + $0x6] sm:$0xff]
        %v490 = vperm.slane %v488, 0
        %v491 = vmul.f32 %v490, %v489
        %v492 = vadd.f32 %v487, %v491
        %v493 = vld [vmem:[%s3 + $0x2] sm:$0x1]
        %v494 = vld [vmem:[#allocation2 + $0x7] sm:$0xff]
        %v495 = vperm.slane %v493, 0
        %v496 = vmul.f32 %v495, %v494
        %v497 = vadd.f32 %v492, %v496
        %v498 = vld [vmem:[%s3 + $0x3] sm:$0x1]
        %v499 = vld [vmem:[#allocation2 + $0x8] sm:$0xff]
        %v500 = vperm.slane %v498, 0
        %v501 = vmul.f32 %v500, %v499
        %v502 = vadd.f32 %v497, %v501
        %v503 = vld [vmem:[#allocation2 + $0xd] sm:$0x7]
        %vm504 = vcmask 518144
        %505 = vst.msk [vmem:[#allocation2 + $0x5] sm:$0x7] %vm504, %v503
        %v506 = vxor.u32 %v502, 2147483648
        %v507 = vmul.f32 %v506, 1.442695
        %v508 = vpow.pop %v507
        %v509 = vadd.f32 %v508, 1.0
        %v510 = vrcp.pop %v509
        %v511 = vmul.f32 %v509, %v510
        %v512 = vsub.f32 1.0, %v511
        %v513 = vmul.f32 %v510, %v512
        %v514 = vadd.f32 %v510, %v513
        %vm515 = vweird.f32 %v509
        %vm516 = vweird.f32 %v510
        %vm517 = vmor %vm515, %vm516
        %v518 = vsel %vm517, %v510, %v514
        %v519 = vand.u32 2147483647, %v509
        %vm520 = vcmp.eq.f32.partialorder %v519, 8.507059e+37
        %v521 = vand.u32 %v509, 2147483648
        %v522 = vor.u32 1.1754944e-38, %v521
        %v523 = vsel %vm520, %v522, %v518
        %v524 = vmul.f32 1.0, %v523
        %v525 = vmul.f32 %v502, %v524
        %v526 = vld [vmem:[%s5] sm:$0xff]
        %v527 = vld [vmem:[%s5 + $0x8] sm:$0xff]
        %v528 = vld [vmem:[%s5 + $0x10] sm:$0xff]
        %v529 = vld [vmem:[%s5 + $0x18] sm:$0xff]
        %v530 = vld [vmem:[%s5 + $0x20] sm:$0xff]
        %v531 = vld [vmem:[%s5 + $0x28] sm:$0xff]
        %v532 = vld [vmem:[%s5 + $0x30] sm:$0xff]
        %v533 = vld [vmem:[%s5 + $0x38] sm:$0xff]
        %v535 = vsel %vm477, %v525, 0
        %537 = vmatpush.msra.mxu0 0.0
        %538 = vmatpush.msra.mxu0 0.0
        %539 = vmatpush.msra.mxu0 0.0
        %540 = vmatpush.msra.mxu0 0.0
        %541 = vmatpush.msra.mxu0 0.0
        %542 = vmatpush.msra.mxu0 0.0
        %543 = vmatpush.msra.mxu0 0.0
        %544 = vmatpush.msra.mxu0 0.0
        %545 = vmatpush.msra.mxu0 %v533
        %546 = vmatpush.msra.mxu0 %v532
        %547 = vmatpush.msra.mxu0 %v531
        %548 = vmatpush.msra.mxu0 %v530
        %549 = vmatpush.msra.mxu0 %v529
        %550 = vmatpush.msra.mxu0 %v528
        %551 = vmatpush.msra.mxu0 %v527
        %552 = vmatpush.msra.mxu0 %v526
        %553 = vmatmul.f32.gmra.mxu0 %v535
        %v554 = vpop.f32.mrf.mxu0
        %v555 = vadd.f32 0.0, %v554
        %556 = vdwg.mxu0
        %v557 = vld [vmem:[%s6] sm:$0xf]
        %v558 = vld [vmem:[%s7] sm:$0x1]
        %v560 = vperm.slane %v558, 0
        %vm562 = vcmask 31744
        %v564 = vsel %vm562, %v555, 0
        %vm566 = vcmask 1043456
        %v568 = vsel %vm566, %v557, 0
        %570 = vmatpush.msra.mxu0 0.0
        %571 = vmatpush.msra.mxu0 0.0
        %572 = vmatpush.msra.mxu0 0.0
        %573 = vmatpush.msra.mxu0 0.0
        %574 = vmatpush.msra.mxu0 0.0
        %575 = vmatpush.msra.mxu0 0.0
        %576 = vmatpush.msra.mxu0 0.0
        %577 = vmatpush.msra.mxu0 0.0
        %578 = vmatpush.msra.mxu0 0.0
        %579 = vmatpush.msra.mxu0 0.0
        %580 = vmatpush.msra.mxu0 0.0
        %581 = vmatpush.msra.mxu0 0.0
        %582 = vmatpush.msra.mxu0 0.0
        %583 = vmatpush.msra.mxu0 0.0
        %584 = vmatpush.msra.mxu0 0.0
        %585 = vmatpush.msra.mxu0 %v568
        %586 = vmatmul.f32.gmra.mxu0 %v564
        %v587 = vpop.f32.mrf.mxu0
        %v588 = vadd.f32 %v560, %v587
        %589 = vdwg.mxu0
        %v590 = vmax.f32 %v588, 0.0
        %vm591 = vcmp.ne.f32.partialorder %v588, %v588
        %v592 = vadd.f32 %v588, 0.0
        %v593 = vand.u32 2147483647, %v588
        %v594 = vsub.f32 0.0, %v593
        %v595 = vmul.f32 %v594, 1.442695
        %v596 = vpow.pop %v595
        %v597 = vadd.f32 %v596, 1.0
        %v598 = vlog2.pop %v597
        %v599 = vmul.f32 %v598, 0.6931472
        %v600 = vmul.f32 -0.5, %v596
        %v601 = vadd.f32 %v600, 1.0
        %v602 = vmul.f32 %v601, %v596
        %v603 = vand.u32 2147483647, %v596
        %vm604 = vcmp.lt.f32.partialorder %v603, 0.0004427343
        %v605 = vsel %vm604, %v602, %v599
        %v606 = vadd.f32 %v590, %v605
        %v607 = vsel %vm591, %v592, %v606
        %v608 = vld [vmem:[%s8] sm:$0xff]
        %v609 = vld [vmem:[%s8 + $0x8] sm:$0xff]
        %v611 = vrot.slane %v607, 1
        %v612 = vrot.slane %v607, 2
        %v613 = vrot.slane %v607, 3
        %v614 = vrot.slane %v607, 4
        %v615 = vrot.slane %v607, 5
        %v616 = vrot.slane %v607, 6
        %v617 = vrot.slane %v607, 7
        %v618 = vperm.slane %v607, 0
        %v619 = vperm.slane %v611, 0
        %v620 = vperm.slane %v612, 0
        %v621 = vperm.slane %v613, 0
        %v622 = vperm.slane %v614, 0
        %v623 = vperm.slane %v615, 0
        %v624 = vperm.slane %v616, 0
        %v625 = vperm.slane %v617, 0
        %v634 = vmul.f32 %v618, %v608
        %v635 = vmul.f32 %v618, %v609
        %v636 = vmul.f32 %v619, %v608
        %v637 = vmul.f32 %v619, %v609
        %v638 = vmul.f32 %v620, %v608
        %v639 = vmul.f32 %v620, %v609
        %v640 = vmul.f32 %v621, %v608
        %v641 = vmul.f32 %v621, %v609
        %v642 = vmul.f32 %v622, %v608
        %v643 = vmul.f32 %v622, %v609
        %v644 = vmul.f32 %v623, %v608
        %v645 = vmul.f32 %v623, %v609
        %v646 = vmul.f32 %v624, %v608
        %v647 = vmul.f32 %v624, %v609
        %v648 = vmul.f32 %v625, %v608
        %v649 = vmul.f32 %v625, %v609
        %v650 = vmul.f32 %v634, 1.442695
        %v651 = vpow.pop %v650
        %v652 = vmul.f32 %v635, 1.442695
        %v653 = vpow.pop %v652
        %v654 = vmul.f32 %v636, 1.442695
        %v655 = vpow.pop %v654
        %v656 = vmul.f32 %v637, 1.442695
        %v657 = vpow.pop %v656
        %v658 = vmul.f32 %v638, 1.442695
        %v659 = vpow.pop %v658
        %v660 = vmul.f32 %v639, 1.442695
        %v661 = vpow.pop %v660
        %v662 = vmul.f32 %v640, 1.442695
        %v663 = vpow.pop %v662
        %v664 = vmul.f32 %v641, 1.442695
        %v665 = vpow.pop %v664
        %v666 = vmul.f32 %v642, 1.442695
        %v667 = vpow.pop %v666
        %v668 = vmul.f32 %v643, 1.442695
        %v669 = vpow.pop %v668
        %v670 = vmul.f32 %v644, 1.442695
        %v671 = vpow.pop %v670
        %v672 = vmul.f32 %v645, 1.442695
        %v673 = vpow.pop %v672
        %v674 = vmul.f32 %v646, 1.442695
        %v675 = vpow.pop %v674
        %v676 = vmul.f32 %v647, 1.442695
        %v677 = vpow.pop %v676
        %v678 = vmul.f32 %v648, 1.442695
        %v679 = vpow.pop %v678
        %v680 = vmul.f32 %v649, 1.442695
        %v681 = vpow.pop %v680
        %682 = vst.msk [vmem:[#allocation4] sm:$0xff] %vm477, %v651
        %683 = vst.msk [vmem:[#allocation4 + $0x8] sm:$0xff] %vm477, %v653
        %684 = vst.msk [vmem:[#allocation4 + $0x10] sm:$0xff] %vm477, %v655
        %685 = vst.msk [vmem:[#allocation4 + $0x18] sm:$0xff] %vm477, %v657
        %686 = vst.msk [vmem:[#allocation4 + $0x20] sm:$0xff] %vm477, %v659
        %687 = vst.msk [vmem:[#allocation4 + $0x28] sm:$0xff] %vm477, %v661
        %688 = vst.msk [vmem:[#allocation4 + $0x30] sm:$0xff] %vm477, %v663
        %689 = vst.msk [vmem:[#allocation4 + $0x38] sm:$0xff] %vm477, %v665
        %690 = vst.msk [vmem:[#allocation4 + $0x40] sm:$0xff] %vm477, %v667
        %691 = vst.msk [vmem:[#allocation4 + $0x48] sm:$0xff] %vm477, %v669
        %692 = vst.msk [vmem:[#allocation4 + $0x50] sm:$0xff] %vm477, %v671
        %693 = vst.msk [vmem:[#allocation4 + $0x58] sm:$0xff] %vm477, %v673
        %694 = vst.msk [vmem:[#allocation4 + $0x60] sm:$0xff] %vm477, %v675
        %695 = vst.msk [vmem:[#allocation4 + $0x68] sm:$0xff] %vm477, %v677
        %696 = vst.msk [vmem:[#allocation4 + $0x70] sm:$0xff] %vm477, %v679
        %697 = vst.msk [vmem:[#allocation4 + $0x78] sm:$0xff] %vm477, %v681
        %v698 = vmul.f32 %v607, %v525
        %v699 = vperm.slane %v555, 0
        %v700 = vlaneseq
        %v701 = vshrl.u32 %v700, 7
        %v702 = vadd.s32 %v701, 4
        %703 = vset.pattern.permute.xlu0 %v702
        %704 = vperm.xlu0 %703, %v699
        %v705 = vpop.permute.xlu0 %704
        %v706 = vlaneseq
        %v707 = vshrl.u32 %v706, 7
        %v708 = vadd.s32 %v707, 12
        %709 = vset.pattern.permute.xlu0 %v708
        %710 = vperm.xlu0 %709, %v699
        %v711 = vpop.permute.xlu0 %710
        %v712 = vperm.slane %v555, 1
        %v713 = vlaneseq
        %v714 = vshrl.u32 %v713, 7
        %v715 = vadd.s32 %v714, 4
        %716 = vset.pattern.permute.xlu0 %v715
        %717 = vperm.xlu0 %716, %v712
        %v718 = vpop.permute.xlu0 %717
        %v719 = vlaneseq
        %v720 = vshrl.u32 %v719, 7
        %v721 = vadd.s32 %v720, 12
        %722 = vset.pattern.permute.xlu0 %v721
        %723 = vperm.xlu0 %722, %v712
        %v724 = vpop.permute.xlu0 %723
        %v725 = vperm.slane %v555, 2
        %v726 = vlaneseq
        %v727 = vshrl.u32 %v726, 7
        %v728 = vadd.s32 %v727, 4
        %729 = vset.pattern.permute.xlu0 %v728
        %730 = vperm.xlu0 %729, %v725
        %v731 = vpop.permute.xlu0 %730
        %v732 = vlaneseq
        %v733 = vshrl.u32 %v732, 7
        %v734 = vadd.s32 %v733, 12
        %735 = vset.pattern.permute.xlu0 %v734
        %736 = vperm.xlu0 %735, %v725
        %v737 = vpop.permute.xlu0 %736
        %v738 = vperm.slane %v555, 3
        %v739 = vlaneseq
        %v740 = vshrl.u32 %v739, 7
        %v741 = vadd.s32 %v740, 4
        %742 = vset.pattern.permute.xlu0 %v741
        %743 = vperm.xlu0 %742, %v738
        %v744 = vpop.permute.xlu0 %743
        %v745 = vlaneseq
        %v746 = vshrl.u32 %v745, 7
        %v747 = vadd.s32 %v746, 12
        %748 = vset.pattern.permute.xlu0 %v747
        %749 = vperm.xlu0 %748, %v738
        %v750 = vpop.permute.xlu0 %749
        %v751 = vperm.slane %v555, 4
        %v752 = vlaneseq
        %v753 = vshrl.u32 %v752, 7
        %v754 = vadd.s32 %v753, 4
        %755 = vset.pattern.permute.xlu0 %v754
        %756 = vperm.xlu0 %755, %v751
        %v757 = vpop.permute.xlu0 %756
        %v758 = vlaneseq
        %v759 = vshrl.u32 %v758, 7
        %v760 = vadd.s32 %v759, 12
        %761 = vset.pattern.permute.xlu0 %v760
        %762 = vperm.xlu0 %761, %v751
        %v763 = vpop.permute.xlu0 %762
        %v764 = vperm.slane %v555, 5
        %v765 = vlaneseq
        %v766 = vshrl.u32 %v765, 7
        %v767 = vadd.s32 %v766, 4
        %768 = vset.pattern.permute.xlu0 %v767
        %769 = vperm.xlu0 %768, %v764
        %v770 = vpop.permute.xlu0 %769
        %v771 = vlaneseq
        %v772 = vshrl.u32 %v771, 7
        %v773 = vadd.s32 %v772, 12
        %774 = vset.pattern.permute.xlu0 %v773
        %775 = vperm.xlu0 %774, %v764
        %v776 = vpop.permute.xlu0 %775
        %v777 = vperm.slane %v555, 6
        %v778 = vlaneseq
        %v779 = vshrl.u32 %v778, 7
        %v780 = vadd.s32 %v779, 4
        %781 = vset.pattern.permute.xlu0 %v780
        %782 = vperm.xlu0 %781, %v777
        %v783 = vpop.permute.xlu0 %782
        %v784 = vlaneseq
        %v785 = vshrl.u32 %v784, 7
        %v786 = vadd.s32 %v785, 12
        %787 = vset.pattern.permute.xlu0 %v786
        %788 = vperm.xlu0 %787, %v777
        %v789 = vpop.permute.xlu0 %788
        %v790 = vperm.slane %v555, 7
        %v791 = vlaneseq
        %v792 = vshrl.u32 %v791, 7
        %v793 = vadd.s32 %v792, 4
        %794 = vset.pattern.permute.xlu0 %v793
        %795 = vperm.xlu0 %794, %v790
        %v796 = vpop.permute.xlu0 %795
        %v797 = vlaneseq
        %v798 = vshrl.u32 %v797, 7
        %v799 = vadd.s32 %v798, 12
        %800 = vset.pattern.permute.xlu0 %v799
        %801 = vperm.xlu0 %800, %v790
        %v802 = vpop.permute.xlu0 %801
        %v804 = vrot.slane %v698, 1
        %v805 = vrot.slane %v698, 2
        %v806 = vrot.slane %v698, 3
        %v807 = vrot.slane %v698, 4
        %v808 = vrot.slane %v698, 5
        %v809 = vrot.slane %v698, 6
        %v810 = vrot.slane %v698, 7
        %v811 = vperm.slane %v698, 0
        %v812 = vperm.slane %v804, 0
        %v813 = vperm.slane %v805, 0
        %v814 = vperm.slane %v806, 0
        %v815 = vperm.slane %v807, 0
        %v816 = vperm.slane %v808, 0
        %v817 = vperm.slane %v809, 0
        %v818 = vperm.slane %v810, 0
        %v827 = vmul.f32 %v705, %v811
        %v828 = vmul.f32 %v711, %v811
        %v829 = vmul.f32 %v718, %v812
        %v830 = vmul.f32 %v724, %v812
        %v831 = vmul.f32 %v731, %v813
        %v832 = vmul.f32 %v737, %v813
        %v833 = vmul.f32 %v744, %v814
        %v834 = vmul.f32 %v750, %v814
        %v835 = vmul.f32 %v757, %v815
        %v836 = vmul.f32 %v763, %v815
        %v837 = vmul.f32 %v770, %v816
        %v838 = vmul.f32 %v776, %v816
        %v839 = vmul.f32 %v783, %v817
        %v840 = vmul.f32 %v789, %v817
        %v841 = vmul.f32 %v796, %v818
        %v842 = vmul.f32 %v802, %v818
        %843 = vst.msk [vmem:[#allocation5] sm:$0xff] %vm477, %v827
        %844 = vst.msk [vmem:[#allocation5 + $0x8] sm:$0xff] %vm477, %v828
        %845 = vst.msk [vmem:[#allocation5 + $0x10] sm:$0xff] %vm477, %v829
        %846 = vst.msk [vmem:[#allocation5 + $0x18] sm:$0xff] %vm477, %v830
        %847 = vst.msk [vmem:[#allocation5 + $0x20] sm:$0xff] %vm477, %v831
        %848 = vst.msk [vmem:[#allocation5 + $0x28] sm:$0xff] %vm477, %v832
        %849 = vst.msk [vmem:[#allocation5 + $0x30] sm:$0xff] %vm477, %v833
        %850 = vst.msk [vmem:[#allocation5 + $0x38] sm:$0xff] %vm477, %v834
        %851 = vst.msk [vmem:[#allocation5 + $0x40] sm:$0xff] %vm477, %v835
        %852 = vst.msk [vmem:[#allocation5 + $0x48] sm:$0xff] %vm477, %v836
        %853 = vst.msk [vmem:[#allocation5 + $0x50] sm:$0xff] %vm477, %v837
        %854 = vst.msk [vmem:[#allocation5 + $0x58] sm:$0xff] %vm477, %v838
        %855 = vst.msk [vmem:[#allocation5 + $0x60] sm:$0xff] %vm477, %v839
        %856 = vst.msk [vmem:[#allocation5 + $0x68] sm:$0xff] %vm477, %v840
        %857 = vst.msk [vmem:[#allocation5 + $0x70] sm:$0xff] %vm477, %v841
        %858 = vst.msk [vmem:[#allocation5 + $0x78] sm:$0xff] %vm477, %v842
        %v859 = vlaneseq
        %v860 = vshrl.u32 %v859, 7
        %v861 = vadd.s32 %v860, 20
        %862 = vset.pattern.permute.xlu0 %v861
        %863 = vperm.xlu0 %862, %v699
        %v864 = vpop.permute.xlu0 %863
        %v865 = vlaneseq
        %v866 = vshrl.u32 %v865, 7
        %v867 = vadd.s32 %v866, 28
        %868 = vset.pattern.permute.xlu0 %v867
        %869 = vperm.xlu0 %868, %v699
        %v870 = vpop.permute.xlu0 %869
        %v871 = vlaneseq
        %v872 = vshrl.u32 %v871, 7
        %v873 = vadd.s32 %v872, 20
        %874 = vset.pattern.permute.xlu0 %v873
        %875 = vperm.xlu0 %874, %v712
        %v876 = vpop.permute.xlu0 %875
        %v877 = vlaneseq
        %v878 = vshrl.u32 %v877, 7
        %v879 = vadd.s32 %v878, 28
        %880 = vset.pattern.permute.xlu0 %v879
        %881 = vperm.xlu0 %880, %v712
        %v882 = vpop.permute.xlu0 %881
        %v883 = vlaneseq
        %v884 = vshrl.u32 %v883, 7
        %v885 = vadd.s32 %v884, 20
        %886 = vset.pattern.permute.xlu0 %v885
        %887 = vperm.xlu0 %886, %v725
        %v888 = vpop.permute.xlu0 %887
        %v889 = vlaneseq
        %v890 = vshrl.u32 %v889, 7
        %v891 = vadd.s32 %v890, 28
        %892 = vset.pattern.permute.xlu0 %v891
        %893 = vperm.xlu0 %892, %v725
        %v894 = vpop.permute.xlu0 %893
        %v895 = vlaneseq
        %v896 = vshrl.u32 %v895, 7
        %v897 = vadd.s32 %v896, 20
        %898 = vset.pattern.permute.xlu0 %v897
        %899 = vperm.xlu0 %898, %v738
        %v900 = vpop.permute.xlu0 %899
        %v901 = vlaneseq
        %v902 = vshrl.u32 %v901, 7
        %v903 = vadd.s32 %v902, 28
        %904 = vset.pattern.permute.xlu0 %v903
        %905 = vperm.xlu0 %904, %v738
        %v906 = vpop.permute.xlu0 %905
        %v907 = vlaneseq
        %v908 = vshrl.u32 %v907, 7
        %v909 = vadd.s32 %v908, 20
        %910 = vset.pattern.permute.xlu0 %v909
        %911 = vperm.xlu0 %910, %v751
        %v912 = vpop.permute.xlu0 %911
        %v913 = vlaneseq
        %v914 = vshrl.u32 %v913, 7
        %v915 = vadd.s32 %v914, 28
        %916 = vset.pattern.permute.xlu0 %v915
        %917 = vperm.xlu0 %916, %v751
        %v918 = vpop.permute.xlu0 %917
        %v919 = vlaneseq
        %v920 = vshrl.u32 %v919, 7
        %v921 = vadd.s32 %v920, 20
        %922 = vset.pattern.permute.xlu0 %v921
        %923 = vperm.xlu0 %922, %v764
        %v924 = vpop.permute.xlu0 %923
        %v925 = vlaneseq
        %v926 = vshrl.u32 %v925, 7
        %v927 = vadd.s32 %v926, 28
        %928 = vset.pattern.permute.xlu0 %v927
        %929 = vperm.xlu0 %928, %v764
        %v930 = vpop.permute.xlu0 %929
        %v931 = vlaneseq
        %v932 = vshrl.u32 %v931, 7
        %v933 = vadd.s32 %v932, 20
        %934 = vset.pattern.permute.xlu0 %v933
        %935 = vperm.xlu0 %934, %v777
        %v936 = vpop.permute.xlu0 %935
        %v937 = vlaneseq
        %v938 = vshrl.u32 %v937, 7
        %v939 = vadd.s32 %v938, 28
        %940 = vset.pattern.permute.xlu0 %v939
        %941 = vperm.xlu0 %940, %v777
        %v942 = vpop.permute.xlu0 %941
        %v943 = vlaneseq
        %v944 = vshrl.u32 %v943, 7
        %v945 = vadd.s32 %v944, 20
        %946 = vset.pattern.permute.xlu0 %v945
        %947 = vperm.xlu0 %946, %v790
        %v948 = vpop.permute.xlu0 %947
        %v949 = vlaneseq
        %v950 = vshrl.u32 %v949, 7
        %v951 = vadd.s32 %v950, 28
        %952 = vset.pattern.permute.xlu0 %v951
        %953 = vperm.xlu0 %952, %v790
        %v954 = vpop.permute.xlu0 %953
        %955 = vst.msk [vmem:[#allocation6] sm:$0xff] %vm477, %v864
        %956 = vst.msk [vmem:[#allocation6 + $0x8] sm:$0xff] %vm477, %v870
        %957 = vst.msk [vmem:[#allocation6 + $0x10] sm:$0xff] %vm477, %v876
        %958 = vst.msk [vmem:[#allocation6 + $0x18] sm:$0xff] %vm477, %v882
        %959 = vst.msk [vmem:[#allocation6 + $0x20] sm:$0xff] %vm477, %v888
        %960 = vst.msk [vmem:[#allocation6 + $0x28] sm:$0xff] %vm477, %v894
        %961 = vst.msk [vmem:[#allocation6 + $0x30] sm:$0xff] %vm477, %v900
        %962 = vst.msk [vmem:[#allocation6 + $0x38] sm:$0xff] %vm477, %v906
        %963 = vst.msk [vmem:[#allocation6 + $0x40] sm:$0xff] %vm477, %v912
        %964 = vst.msk [vmem:[#allocation6 + $0x48] sm:$0xff] %vm477, %v918
        %965 = vst.msk [vmem:[#allocation6 + $0x50] sm:$0xff] %vm477, %v924
        %966 = vst.msk [vmem:[#allocation6 + $0x58] sm:$0xff] %vm477, %v930
        %967 = vst.msk [vmem:[#allocation6 + $0x60] sm:$0xff] %vm477, %v936
        %968 = vst.msk [vmem:[#allocation6 + $0x68] sm:$0xff] %vm477, %v942
        %969 = vst.msk [vmem:[#allocation6 + $0x70] sm:$0xff] %vm477, %v948
        %970 = vst.msk [vmem:[#allocation6 + $0x78] sm:$0xff] %vm477, %v954
        %v971 = vld [vmem:[#allocation3] sm:$0xff]
        %v972 = vld [vmem:[#allocation3 + $0x8] sm:$0xff]
        %s973 = smul.u32 0, 16
        %s974 = scalar_lea.vmem [#allocation4], %s973
        %v975 = vld [vmem:[%s974] sm:$0xff]
        %v976 = vld [vmem:[%s974 + $0x8] sm:$0xff]
        %v977 = vmul.f32 %v975, %v971
        %v978 = vmul.f32 %v976, %v972
        %s979 = scalar_lea.vmem [#allocation5], %s973
        %v980 = vld [vmem:[%s979] sm:$0xff]
        %v981 = vld [vmem:[%s979 + $0x8] sm:$0xff]
        %v982 = vadd.f32 %v977, %v980
        %v983 = vadd.f32 %v978, %v981
        %s984 = scalar_lea.vmem [#allocation6], %s973
        %v985 = vld [vmem:[%s984] sm:$0xff]
        %v986 = vld [vmem:[%s984 + $0x8] sm:$0xff]
        %v987 = vmul.f32 %v982, %v985
        %v988 = vmul.f32 %v983, %v986
        %v989 = vsel %vm477, %v987, 0.0
        %v990 = vsel %vm477, %v988, 0.0
        %v991 = vadd.f32 %v989, %v990
        %v992 = vrot.slane %v991, 4
        %v993 = vadd.f32 %v991, %v992
        %v994 = vrot.slane %v993, 2
        %v995 = vadd.f32 %v993, %v994
        %v996 = vrot.slane %v995, 1
        %v997 = vadd.f32 %v995, %v996
        %s998 = sadd.s32 0, 1
        %s999 = smul.u32 %s998, 16
        %s1000 = scalar_lea.vmem [#allocation4], %s999
        %v1001 = vld [vmem:[%s1000] sm:$0xff]
        %v1002 = vld [vmem:[%s1000 + $0x8] sm:$0xff]
        %v1003 = vmul.f32 %v1001, %v982
        %v1004 = vmul.f32 %v1002, %v983
        %s1005 = scalar_lea.vmem [#allocation5], %s999
        %v1006 = vld [vmem:[%s1005] sm:$0xff]
        %v1007 = vld [vmem:[%s1005 + $0x8] sm:$0xff]
        %v1008 = vadd.f32 %v1003, %v1006
        %v1009 = vadd.f32 %v1004, %v1007
        %s1010 = scalar_lea.vmem [#allocation6], %s999
        %v1011 = vld [vmem:[%s1010] sm:$0xff]
        %v1012 = vld [vmem:[%s1010 + $0x8] sm:$0xff]
        %v1013 = vmul.f32 %v1008, %v1011
        %v1014 = vmul.f32 %v1009, %v1012
        %v1015 = vsel %vm477, %v1013, 0.0
        %v1016 = vsel %vm477, %v1014, 0.0
        %v1017 = vadd.f32 %v1015, %v1016
        %v1018 = vrot.slane %v1017, 4
        %v1019 = vadd.f32 %v1017, %v1018
        %v1020 = vrot.slane %v1019, 2
        %v1021 = vadd.f32 %v1019, %v1020
        %v1022 = vrot.slane %v1021, 1
        %v1023 = vadd.f32 %v1021, %v1022
        %s1024 = sadd.s32 0, 2
        %s1025 = smul.u32 %s1024, 16
        %s1026 = scalar_lea.vmem [#allocation4], %s1025
        %v1027 = vld [vmem:[%s1026] sm:$0xff]
        %v1028 = vld [vmem:[%s1026 + $0x8] sm:$0xff]
        %v1029 = vmul.f32 %v1027, %v1008
        %v1030 = vmul.f32 %v1028, %v1009
        %s1031 = scalar_lea.vmem [#allocation5], %s1025
        %v1032 = vld [vmem:[%s1031] sm:$0xff]
        %v1033 = vld [vmem:[%s1031 + $0x8] sm:$0xff]
        %v1034 = vadd.f32 %v1029, %v1032
        %v1035 = vadd.f32 %v1030, %v1033
        %s1036 = scalar_lea.vmem [#allocation6], %s1025
        %v1037 = vld [vmem:[%s1036] sm:$0xff]
        %v1038 = vld [vmem:[%s1036 + $0x8] sm:$0xff]
        %v1039 = vmul.f32 %v1034, %v1037
        %v1040 = vmul.f32 %v1035, %v1038
        %v1041 = vsel %vm477, %v1039, 0.0
        %v1042 = vsel %vm477, %v1040, 0.0
        %v1043 = vadd.f32 %v1041, %v1042
        %v1044 = vrot.slane %v1043, 4
        %v1045 = vadd.f32 %v1043, %v1044
        %v1046 = vrot.slane %v1045, 2
        %v1047 = vadd.f32 %v1045, %v1046
        %v1048 = vrot.slane %v1047, 1
        %v1049 = vadd.f32 %v1047, %v1048
        %s1050 = sadd.s32 0, 3
        %s1051 = smul.u32 %s1050, 16
        %s1052 = scalar_lea.vmem [#allocation4], %s1051
        %v1053 = vld [vmem:[%s1052] sm:$0xff]
        %v1054 = vld [vmem:[%s1052 + $0x8] sm:$0xff]
        %v1055 = vmul.f32 %v1053, %v1034
        %v1056 = vmul.f32 %v1054, %v1035
        %s1057 = scalar_lea.vmem [#allocation5], %s1051
        %v1058 = vld [vmem:[%s1057] sm:$0xff]
        %v1059 = vld [vmem:[%s1057 + $0x8] sm:$0xff]
        %v1060 = vadd.f32 %v1055, %v1058
        %v1061 = vadd.f32 %v1056, %v1059
        %s1062 = scalar_lea.vmem [#allocation6], %s1051
        %v1063 = vld [vmem:[%s1062] sm:$0xff]
        %v1064 = vld [vmem:[%s1062 + $0x8] sm:$0xff]
        %v1065 = vmul.f32 %v1060, %v1063
        %v1066 = vmul.f32 %v1061, %v1064
        %v1067 = vsel %vm477, %v1065, 0.0
        %v1068 = vsel %vm477, %v1066, 0.0
        %v1069 = vadd.f32 %v1067, %v1068
        %v1070 = vrot.slane %v1069, 4
        %v1071 = vadd.f32 %v1069, %v1070
        %v1072 = vrot.slane %v1071, 2
        %v1073 = vadd.f32 %v1071, %v1072
        %v1074 = vrot.slane %v1073, 1
        %v1075 = vadd.f32 %v1073, %v1074
        %s1076 = sadd.s32 0, 4
        %s1077 = smul.u32 %s1076, 16
        %s1078 = scalar_lea.vmem [#allocation4], %s1077
        %v1079 = vld [vmem:[%s1078] sm:$0xff]
        %v1080 = vld [vmem:[%s1078 + $0x8] sm:$0xff]
        %v1081 = vmul.f32 %v1079, %v1060
        %v1082 = vmul.f32 %v1080, %v1061
        %s1083 = scalar_lea.vmem [#allocation5], %s1077
        %v1084 = vld [vmem:[%s1083] sm:$0xff]
        %v1085 = vld [vmem:[%s1083 + $0x8] sm:$0xff]
        %v1086 = vadd.f32 %v1081, %v1084
        %v1087 = vadd.f32 %v1082, %v1085
        %s1088 = scalar_lea.vmem [#allocation6], %s1077
        %v1089 = vld [vmem:[%s1088] sm:$0xff]
        %v1090 = vld [vmem:[%s1088 + $0x8] sm:$0xff]
        %v1091 = vmul.f32 %v1086, %v1089
        %v1092 = vmul.f32 %v1087, %v1090
        %v1093 = vsel %vm477, %v1091, 0.0
        %v1094 = vsel %vm477, %v1092, 0.0
        %v1095 = vadd.f32 %v1093, %v1094
        %v1096 = vrot.slane %v1095, 4
        %v1097 = vadd.f32 %v1095, %v1096
        %v1098 = vrot.slane %v1097, 2
        %v1099 = vadd.f32 %v1097, %v1098
        %v1100 = vrot.slane %v1099, 1
        %v1101 = vadd.f32 %v1099, %v1100
        %s1102 = sadd.s32 0, 5
        %s1103 = smul.u32 %s1102, 16
        %s1104 = scalar_lea.vmem [#allocation4], %s1103
        %v1105 = vld [vmem:[%s1104] sm:$0xff]
        %v1106 = vld [vmem:[%s1104 + $0x8] sm:$0xff]
        %v1107 = vmul.f32 %v1105, %v1086
        %v1108 = vmul.f32 %v1106, %v1087
        %s1109 = scalar_lea.vmem [#allocation5], %s1103
        %v1110 = vld [vmem:[%s1109] sm:$0xff]
        %v1111 = vld [vmem:[%s1109 + $0x8] sm:$0xff]
        %v1112 = vadd.f32 %v1107, %v1110
        %v1113 = vadd.f32 %v1108, %v1111
        %s1114 = scalar_lea.vmem [#allocation6], %s1103
        %v1115 = vld [vmem:[%s1114] sm:$0xff]
        %v1116 = vld [vmem:[%s1114 + $0x8] sm:$0xff]
        %v1117 = vmul.f32 %v1112, %v1115
        %v1118 = vmul.f32 %v1113, %v1116
        %v1119 = vsel %vm477, %v1117, 0.0
        %v1120 = vsel %vm477, %v1118, 0.0
        %v1121 = vadd.f32 %v1119, %v1120
        %v1122 = vrot.slane %v1121, 4
        %v1123 = vadd.f32 %v1121, %v1122
        %v1124 = vrot.slane %v1123, 2
        %v1125 = vadd.f32 %v1123, %v1124
        %v1126 = vrot.slane %v1125, 1
        %v1127 = vadd.f32 %v1125, %v1126
        %s1128 = sadd.s32 0, 6
        %s1129 = smul.u32 %s1128, 16
        %s1130 = scalar_lea.vmem [#allocation4], %s1129
        %v1131 = vld [vmem:[%s1130] sm:$0xff]
        %v1132 = vld [vmem:[%s1130 + $0x8] sm:$0xff]
        %v1133 = vmul.f32 %v1131, %v1112
        %v1134 = vmul.f32 %v1132, %v1113
        %s1135 = scalar_lea.vmem [#allocation5], %s1129
        %v1136 = vld [vmem:[%s1135] sm:$0xff]
        %v1137 = vld [vmem:[%s1135 + $0x8] sm:$0xff]
        %v1138 = vadd.f32 %v1133, %v1136
        %v1139 = vadd.f32 %v1134, %v1137
        %s1140 = scalar_lea.vmem [#allocation6], %s1129
        %v1141 = vld [vmem:[%s1140] sm:$0xff]
        %v1142 = vld [vmem:[%s1140 + $0x8] sm:$0xff]
        %v1143 = vmul.f32 %v1138, %v1141
        %v1144 = vmul.f32 %v1139, %v1142
        %v1145 = vsel %vm477, %v1143, 0.0
        %v1146 = vsel %vm477, %v1144, 0.0
        %v1147 = vadd.f32 %v1145, %v1146
        %v1148 = vrot.slane %v1147, 4
        %v1149 = vadd.f32 %v1147, %v1148
        %v1150 = vrot.slane %v1149, 2
        %v1151 = vadd.f32 %v1149, %v1150
        %v1152 = vrot.slane %v1151, 1
        %v1153 = vadd.f32 %v1151, %v1152
        %s1154 = sadd.s32 0, 7
        %s1155 = smul.u32 %s1154, 16
        %s1156 = scalar_lea.vmem [#allocation4], %s1155
        %v1157 = vld [vmem:[%s1156] sm:$0xff]
        %v1158 = vld [vmem:[%s1156 + $0x8] sm:$0xff]
        %v1159 = vmul.f32 %v1157, %v1138
        %v1160 = vmul.f32 %v1158, %v1139
        %s1161 = scalar_lea.vmem [#allocation5], %s1155
        %v1162 = vld [vmem:[%s1161] sm:$0xff]
        %v1163 = vld [vmem:[%s1161 + $0x8] sm:$0xff]
        %v1164 = vadd.f32 %v1159, %v1162
        %v1165 = vadd.f32 %v1160, %v1163
        %s1166 = scalar_lea.vmem [#allocation6], %s1155
        %v1167 = vld [vmem:[%s1166] sm:$0xff]
        %v1168 = vld [vmem:[%s1166 + $0x8] sm:$0xff]
        %v1169 = vmul.f32 %v1164, %v1167
        %v1170 = vmul.f32 %v1165, %v1168
        %v1171 = vsel %vm477, %v1169, 0.0
        %v1172 = vsel %vm477, %v1170, 0.0
        %v1173 = vadd.f32 %v1171, %v1172
        %v1174 = vrot.slane %v1173, 4
        %v1175 = vadd.f32 %v1173, %v1174
        %v1176 = vrot.slane %v1175, 2
        %v1177 = vadd.f32 %v1175, %v1176
        %v1178 = vrot.slane %v1177, 1
        %v1179 = vadd.f32 %v1177, %v1178
        %vm1180 = vcmask 1040384
        %v1181 = vsel %vm1180, %v997, %v1023
        %vm1182 = vcmask 1041408
        %v1183 = vsel %vm1182, %v1181, %v1049
        %vm1184 = vcmask 1042432
        %v1185 = vsel %vm1184, %v1183, %v1075
        %v1186 = vsel %vm566, %v1185, %v1101
        %vm1187 = vcmask 1044480
        %v1188 = vsel %vm1187, %v1186, %v1127
        %vm1189 = vcmask 1045504
        %v1190 = vsel %vm1189, %v1188, %v1153
        %vm1191 = vcmask 1046528
        %v1192 = vsel %vm1191, %v1190, %v1179
        %1193 = vst.msk [vmem:[#allocation7] sm:$0xff] %vm477, %v1192
        %1194 = vst.msk [vmem:[#allocation3] sm:$0xff] %vm477, %v1164
        %1195 = vst.msk [vmem:[#allocation3 + $0x8] sm:$0xff] %vm477, %v1165
        %v1196 = vld [vmem:[#allocation7] sm:$0xff]
        %v1197 = vld [vmem:[%s9] sm:$0x1]
        %v1199 = vperm.slane %v1197, 0
        %v1201 = vmul.f32 %v525, %v1199
        %v1202 = vadd.f32 %v1196, %v1201
        %v1203 = vxor.u32 %v475, 2147483648
        %v1204 = vmul.f32 %v1203, 1.442695
        %v1205 = vpow.pop %v1204
        %v1206 = vadd.f32 %v1205, 1.0
        %v1207 = vrcp.pop %v1206
        %v1208 = vmul.f32 %v1206, %v1207
        %v1209 = vsub.f32 1.0, %v1208
        %v1210 = vmul.f32 %v1207, %v1209
        %v1211 = vadd.f32 %v1207, %v1210
        %vm1212 = vweird.f32 %v1206
        %vm1213 = vweird.f32 %v1207
        %vm1214 = vmor %vm1212, %vm1213
        %v1215 = vsel %vm1214, %v1207, %v1211
        %v1216 = vand.u32 2147483647, %v1206
        %vm1217 = vcmp.eq.f32.partialorder %v1216, 8.507059e+37
        %v1218 = vand.u32 %v1206, 2147483648
        %v1219 = vor.u32 1.1754944e-38, %v1218
        %v1220 = vsel %vm1217, %v1219, %v1215
        %v1221 = vmul.f32 1.0, %v1220
        %v1222 = vmul.f32 %v475, %v1221
        %1224 = vrot.lane.b32.xlu0 %v1222, 64
        %v1225 = vpop.permute.xlu0 %1224
        %v1227 = vmul.f32 %v1202, %v1225
        %v1228 = vld [vmem:[%s10] sm:$0xff]
        %v1229 = vld [vmem:[%s10 + $0x8] sm:$0xff]
        %v1230 = vld [vmem:[%s10 + $0x10] sm:$0xff]
        %v1231 = vld [vmem:[%s10 + $0x18] sm:$0xff]
        %v1232 = vld [vmem:[%s10 + $0x20] sm:$0xff]
        %v1233 = vld [vmem:[%s10 + $0x28] sm:$0xff]
        %v1234 = vld [vmem:[%s10 + $0x30] sm:$0xff]
        %v1235 = vld [vmem:[%s10 + $0x38] sm:$0xff]
        %v1237 = vsel %vm477, %v1227, 0
        %1239 = vmatpush.msra.mxu0 0.0
        %1240 = vmatpush.msra.mxu0 0.0
        %1241 = vmatpush.msra.mxu0 0.0
        %1242 = vmatpush.msra.mxu0 0.0
        %1243 = vmatpush.msra.mxu0 0.0
        %1244 = vmatpush.msra.mxu0 0.0
        %1245 = vmatpush.msra.mxu0 0.0
        %1246 = vmatpush.msra.mxu0 0.0
        %1247 = vmatpush.msra.mxu0 %v1235
        %1248 = vmatpush.msra.mxu0 %v1234
        %1249 = vmatpush.msra.mxu0 %v1233
        %1250 = vmatpush.msra.mxu0 %v1232
        %1251 = vmatpush.msra.mxu0 %v1231
        %1252 = vmatpush.msra.mxu0 %v1230
        %1253 = vmatpush.msra.mxu0 %v1229
        %1254 = vmatpush.msra.mxu0 %v1228
        %1255 = vmatmul.f32.gmra.mxu0 %v1237
        %v1256 = vpop.f32.mrf.mxu0
        %v1257 = vadd.f32 %v419, %v1256
        %1258 = vdwg.mxu0
        %1259 = vst.msk [vmem:[%s401] sm:$0xff] %vm421, %v1257
        %s1260 = sand.u32 %s285, 1
        %s1261 = scalar_lea.sflag [#allocation9], %s1260
        %s1262 = sand.u32 %s285, 1
        %s1263 = smul.addr %s1262, 8
        %s1264 = scalar_lea.vmem [#allocation8], %s1263
        // Predicated region
        $region69: #{tpu_custom_call.1} parent=63 // pred_check
          %p1265 = pneg %p295
        $region70: #{tpu_custom_call.1} parent=63 // pred_check_branch
          %1267 = sbr.rel (%p1265) target = $region72
        $region71: #{tpu_custom_call.1} parent=63 // pred_region
          %1269 = vsyncadd %s1261, 0
          %s1270 = smul.addr %s29, 2
          %s1271 = sadd.s32 %s30, %s1270
          %s1272 = smul.addr %s1271, 8
          %s1273 = scalar_lea.hbm %s11, %s1272
          %s1275 = sshll.u32 %s1264, 4
          %s1276 = int_to_ptr.vmem [resolvable:$true] %s1275
          %s1277 = sshll.u32 %s1273, 4
          %s1278 = int_to_ptr.hbm [resolvable:$true] %s1277
          %1280 = dma.vmem_to_hbm [thread:$0]  %s1276, 128, %s1278, %s1261
        $region72: #{tpu_custom_call.1} parent=63 // pred_fallthru
          _
      $region64: #{tpu_custom_call.1} parent=5 // pred_fallthru
        _
      %p1281 = scmp.le.s32.totalorder 2, %s20
      // Predicated region
      $region73: #{tpu_custom_call.1} parent=5 // pred_check
        %p1282 = pneg %p1281
      $region74: #{tpu_custom_call.1} parent=5 // pred_check_branch
        %1284 = sbr.rel (%p1282) target = $region76
      $region75: #{tpu_custom_call.1} parent=5 // pred_region
        %s1285 = ssub.s32 %s20, 2
        // Predicated region
        $region77: #{tpu_custom_call.1} parent=75 // pred_check
          %p1286 = pneg %p301
        $region78: #{tpu_custom_call.1} parent=75 // pred_check_branch
          %1288 = sbr.rel (%p1286) target = $region80
        $region79: #{tpu_custom_call.1} parent=75 // pred_region
          %s1289 = sand.u32 %s286, 1
          %s1290 = scalar_lea.sflag [#allocation9], %s1289
          %s1291 = sand.u32 %s286, 1
          %s1292 = smul.addr %s1291, 8
          %s1293 = scalar_lea.vmem [#allocation8], %s1292
          %1295 = dma.done %s1290, 128
        $region80: #{tpu_custom_call.1} parent=75 // pred_fallthru
          _
      $region76: #{tpu_custom_call.1} parent=5 // pred_fallthru
        _
    $region6: #{tpu_custom_call.1} parent=1 // loop_footer
      %s24 = sadd.s32 1, %s20
    $region7: #{tpu_custom_call.1} parent=1 // loop_footer_branch
      %19 = sbr.rel target = $region3
    $region8: #{tpu_custom_call.1} parent=1 // loop_exit
      _
    %1296 = vsyncpa [#allocation9], 1
    %s1297 = scalar_lea.sflag [#allocation9], 1
    %1298 = vsyncpa %s1297, 1

</llo_original>
